<compile_context>
chip_gen: v7x
topology: tpu7x:2x2x1
jax: 0.10.0
libtpu: 0.0.40
codegen_flags: <defaults>
</compile_context>

<pallas_src>
import functools

import jax
import jax.numpy as jnp
from jax.experimental import pallas as pl
from jax.experimental.pallas import tpu as pltpu

SWISH_SCALE = 1.6768   # matches swish_jit_fwd: x * sigmoid(x) * 1.6768
LANE = 128             # TPU lane width; channel dims are zero-padded to this


def _round_up(x, m):
    return (x + m - 1) // m * m


def _swish(x):
    return x * jax.nn.sigmoid(x) * SWISH_SCALE


# ---------------------------------------------------------------------------
# Kernels
# ---------------------------------------------------------------------------

def _block_kernel(x_ref, wpw_ref, bpw_ref, wdw_ref, bdw_ref, o_ref, xpad_ref,
                  *, H, W):
    """Fused [1x1 conv + swish + depthwise 3x3 (stride 1) + swish], one image.

    x_ref:    (1, H*W, Cin_p)  bf16  spatially-flattened NHWC input
    wpw_ref:  (Cin_p, C_p)     bf16  omega-scaled 1x1-conv weight (transposed)
    bpw_ref:  (1, C_p)         f32   beta-scaled 1x1-conv bias
    wdw_ref:  (9, C_p)         f32   omega-scaled depthwise taps (row = kh*3+kw)
    bdw_ref:  (1, C_p)         f32   beta-scaled depthwise bias
    o_ref:    (1, H, W, C_p)   bf16  block output (stride-1 resolution)
    xpad_ref: (H+2, W+2, C_p)  f32   VMEM scratch: zero-haloed pw+swish output
    """
    C = o_ref.shape[-1]

    # --- 1x1 conv == lane-dense bf16 matmul on the MXU, fused swish (f32) ----
    y = jnp.dot(x_ref[0], wpw_ref[...], preferred_element_type=jnp.float32)
    y = _swish(y + bpw_ref[...])                     # (H*W, C_p) f32

    # --- stage into zero-haloed VMEM scratch (halo handled on-chip) ----------
    xpad_ref[...] = jnp.zeros_like(xpad_ref)
    for h in range(H):                               # per-row stores: no reshape
        xpad_ref[h + 1, 1:W + 1, :] = y[h * W:(h + 1) * W, :]
    xp = xpad_ref[...]                               # (H+2, W+2, C_p) f32

    # --- depthwise 3x3 (stride 1), taps broadcast over (H, W), fused swish ---
    acc = jnp.zeros((H, W, C), jnp.float32)
    for kh in range(3):
        for kw in range(3):
            acc = acc + xp[kh:kh + H, kw:kw + W, :] * wdw_ref[kh * 3 + kw, :]
    acc = _swish(acc + bdw_ref[...])
    o_ref[0] = acc.astype(o_ref.dtype)


def _head_kernel(x_ref, wpw_ref, bpw_ref, wfc_ref, bfc_ref, o_ref):
    """Fused [1x1 conv + swish + global-avg-pool + Linear], one image.

    x_ref:  (1, H*W, Cin_p) bf16    wpw_ref: (Cin_p, C8_p) bf16
    bpw_ref:(1, C8_p) f32           wfc_ref: (C8_p, O_p)   bf16
    bfc_ref:(1, O_p)  f32           o_ref:   (1, 1, O_p)   f32
    """
    y = jnp.dot(x_ref[0], wpw_ref[...], preferred_element_type=jnp.float32)
    y = _swish(y + bpw_ref[...])                     # (H*W, C8_p) f32
    feats = jnp.mean(y, axis=0, keepdims=True)       # AdaptiveAvgPool2d(1)
    logits = jnp.dot(feats.astype(wfc_ref.dtype), wfc_ref[...],
                     preferred_element_type=jnp.float32)
    o_ref[0] = (logits + bfc_ref[...]).astype(o_ref.dtype)


# ---------------------------------------------------------------------------
# pallas_call wrappers
# ---------------------------------------------------------------------------

def fused_block(x3, H, W, wpw, bpw, wdw, bdw):
    N, HW, Cin_p = x3.shape
    C_p = wpw.shape[1]
    return pl.pallas_call(
        functools.partial(_block_kernel, H=H, W=W),
        out_shape=jax.ShapeDtypeStruct((N, H, W, C_p), jnp.bfloat16),
        grid=(N,),
        in_specs=[
            pl.BlockSpec((1, HW, Cin_p), lambda i: (i, 0, 0)),
            pl.BlockSpec((Cin_p, C_p), lambda i: (0, 0)),
            pl.BlockSpec((1, C_p), lambda i: (0, 0)),
            pl.BlockSpec((9, C_p), lambda i: (0, 0)),
            pl.BlockSpec((1, C_p), lambda i: (0, 0)),
        ],
        out_specs=pl.BlockSpec((1, H, W, C_p), lambda i: (i, 0, 0, 0)),
        scratch_shapes=[pltpu.VMEM((H + 2, W + 2, C_p), jnp.float32)],
        compiler_params=pltpu.CompilerParams(
            dimension_semantics=("parallel",)),
    )(x3, wpw, bpw, wdw, bdw)


def fused_head(x3, wpw, bpw, wfc, bfc):
    N, HW, Cin_p = x3.shape
    C8_p = wpw.shape[1]
    O_p = wfc.shape[1]
    return pl.pallas_call(
        _head_kernel,
        out_shape=jax.ShapeDtypeStruct((N, 1, O_p), jnp.float32),
        grid=(N,),
        in_specs=[
            pl.BlockSpec((1, HW, Cin_p), lambda i: (i, 0, 0)),
            pl.BlockSpec((Cin_p, C8_p), lambda i: (0, 0)),
            pl.BlockSpec((1, C8_p), lambda i: (0, 0)),
            pl.BlockSpec((C8_p, O_p), lambda i: (0, 0)),
            pl.BlockSpec((1, O_p), lambda i: (0, 0)),
        ],
        out_specs=pl.BlockSpec((1, 1, O_p), lambda i: (i, 0, 0)),
        compiler_params=pltpu.CompilerParams(
            dimension_semantics=("parallel",)),
    )(x3, wpw, bpw, wfc, bfc)


# ---------------------------------------------------------------------------
# Parameter construction (kernel-ready: scaled, transposed, lane-padded, cast)
# ---------------------------------------------------------------------------

def build_params(key, n, L1, L2, L3, beta):
    # TODO(synk): torch uses QR-based orthogonal_ init (x cols**0.5); plain
    # normal(0,1) is used here — omega/beta scaling still matches the module.
    blocks = []
    cur = 3

    def nk():
        nonlocal key
        key, sub = jax.random.split(key)
        return sub

    def pw_weights(cin, cout):
        w = jax.random.normal(nk(), (cout, cin), jnp.float32)
        b = jnp.zeros((cout,), jnp.float32)
        omega = float(cin) ** -0.5                    # (n_in//groups * 1**2)^-0.5
        cin_p, cout_p = _round_up(cin, LANE), _round_up(cout, LANE)
        wk = jnp.zeros((cin_p, cout_p), jnp.float32)
        wk = wk.at[:cin, :cout].set((omega * w).T).astype(jnp.bfloat16)
        bk = jnp.zeros((1, cout_p), jnp.float32).at[0, :cout].set(beta * b)
        return wk, bk

    def dw_weights(c):
        w = jax.random.normal(nk(), (c, 1, 3, 3), jnp.float32)
        b = jnp.zeros((c,), jnp.float32)
        omega = 9.0 ** -0.5                           # (n_in//groups * 3**2)^-0.5
        c_p = _round_up(c, LANE)
        wk = jnp.zeros((9, c_p), jnp.float32)
        wk = wk.at[:, :c].set((omega * w).reshape(c, 9).T)
        bk = jnp.zeros((1, c_p), jnp.float32).at[0, :c].set(beta * b)
        return wk, bk

    def add_block(cout, stride):
        nonlocal cur
        wpw, bpw = pw_weights(cur, cout)
        cur = cout
        wdw, bdw = dw_weights(cur)
        blocks.append(dict(wpw=wpw, bpw=bpw, wdw=wdw, bdw=bdw, stride=stride))

    for i in range(L1):
        add_block(n if i == 0 else cur, 1)
    add_block(cur, 2)
    for i in range(L2):
        add_block(2 * n if i == 0 else cur, 1)
    add_block(cur, 2)
    for i in range(L3):
        add_block(4 * n if i == 0 else cur, 1)
    add_block(cur, 2)

    # head: pointwise cur -> 8n (+swish), global-avg-pool, Linear(8n -> 10)
    wpw, bpw = pw_weights(cur, 8 * n)
    cur = 8 * n
    num_classes = 10
    fc_w = jax.random.normal(nk(), (num_classes, cur), jnp.float32)
    fc_b = jnp.zeros((num_classes,), jnp.float32)
    fc_omega = float(cur) ** -0.5
    cur_p, o_p = _round_up(cur, LANE), _round_up(num_classes, LANE)
    wfc = jnp.zeros((cur_p, o_p), jnp.float32)
    wfc = wfc.at[:cur, :num_classes].set((fc_omega * fc_w).T).astype(jnp.bfloat16)
    bfc = jnp.zeros((1, o_p), jnp.float32).at[0, :num_classes].set(beta * fc_b)

    return dict(blocks=blocks,
                head=dict(wpw=wpw, bpw=bpw, wfc=wfc, bfc=bfc),
                num_classes=num_classes)


# ---------------------------------------------------------------------------
# Forward
# ---------------------------------------------------------------------------

def convnet_forward(params, x_nchw):
    # Boundary: NCHW (torch convention) -> NHWC, channels lane-padded to 128,
    # bf16 activations, spatial dims flattened for the kernels.
    x = jnp.transpose(x_nchw, (0, 2, 3, 1))
    N, H, W, C0 = x.shape
    cin_p = params["blocks"][0]["wpw"].shape[0]
    x = jnp.pad(x, ((0, 0), (0, 0), (0, 0), (0, cin_p - C0)))
    x = x.astype(jnp.bfloat16).reshape(N, H * W, cin_p)

    h, w = H, W
    for blk in params["blocks"]:
        y4 = fused_block(x, h, w, blk["wpw"], blk["bpw"],
                         blk["wdw"], blk["bdw"])        # (N, h, w, C_p) bf16
        s = blk["stride"]
        if s > 1:
            # TODO(synk): fold the stride-2 subsample into the kernel (strided
            # VMEM read); kept as an XLA slice for guaranteed-clean lowering.
            y4 = y4[:, ::s, ::s, :]
            h, w = h // s, w // s
        x = y4.reshape(N, h * w, y4.shape[-1])          # free reshape

    hd = params["head"]
    logits = fused_head(x, hd["wpw"], hd["bpw"], hd["wfc"], hd["bfc"])
    return logits.reshape(N, -1)[:, :params["num_classes"]]


if __name__ == "__main__":
    key = jax.random.PRNGKey(0)
    kx, kp = jax.random.split(key)

    n, L1, L2, L3, beta = 8, 1, 1, 1, 1.0
    params = build_params(kp, n, L1, L2, L3, beta)

    # small CIFAR-like input: batch=2, 3 channels, 16x16 spatial (NCHW)
    x = jax.random.normal(kx, (2, 3, 16, 16), jnp.float32)

    out = convnet_forward(params, x)
    out = jax.block_until_ready(out)
    assert out.shape == (2, 10), out.shape
    assert bool(jnp.all(jnp.isfinite(out)))
    print("KERNEL_OK")
</pallas_src>

<mosaic_0001>
module attributes {stable_mosaic.version = 11 : i64} {
  func.func @_block_kernel(%arg0: i32, %arg1: memref<1x256x128xbf16, #tpu.memory_space<vmem>>, %arg2: memref<128x128xbf16, #tpu.memory_space<vmem>>, %arg3: memref<1x128xf32, #tpu.memory_space<vmem>>, %arg4: memref<9x128xf32, #tpu.memory_space<vmem>>, %arg5: memref<1x128xf32, #tpu.memory_space<vmem>>, %arg6: memref<1x16x16x128xbf16, #tpu.memory_space<vmem>>, %arg7: memref<18x18x128xf32, #tpu.memory_space<vmem>>) attributes {dimension_semantics = [#tpu.dimension_semantics<parallel>], iteration_bounds = array<i64: 2>, scalar_prefetch = 0 : i64, scratch_operands = 1 : i64, tpu.core_type = #tpu.core_type<tc>, window_params = [{transform_indices = @transform_0, window_bounds = array<i64: 1, 256, 128>}, {pipeline_mode = #tpu.pipeline_mode<synchronous>, transform_indices = @transform_1, window_bounds = array<i64: 128, 128>}, {pipeline_mode = #tpu.pipeline_mode<synchronous>, transform_indices = @transform_2, window_bounds = array<i64: 1, 128>}, {pipeline_mode = #tpu.pipeline_mode<synchronous>, transform_indices = @transform_3, window_bounds = array<i64: 9, 128>}, {pipeline_mode = #tpu.pipeline_mode<synchronous>, transform_indices = @transform_4, window_bounds = array<i64: 1, 128>}, {transform_indices = @transform_5, window_bounds = array<i64: 1, 16, 16, 128>}]} {
    %c0 = arith.constant 0 : index
    %c0_0 = arith.constant 0 : index
    %c0_1 = arith.constant 0 : index
    %0 = vector.load %arg1[%c0, %c0_0, %c0_1] : memref<1x256x128xbf16, #tpu.memory_space<vmem>>, vector<1x256x128xbf16>
    %1 = vector.shape_cast %0 : vector<1x256x128xbf16> to vector<256x128xbf16>
    %c0_2 = arith.constant 0 : index
    %c0_3 = arith.constant 0 : index
    %2 = vector.load %arg2[%c0_2, %c0_3] : memref<128x128xbf16, #tpu.memory_space<vmem>>, vector<128x128xbf16>
    %cst = arith.constant dense<0.000000e+00> : vector<256x128xf32>
    %3 = tpu.matmul %1, %2, %cst {dimension_numbers = #tpu.dot_dimension_numbers<[1], [0], [0], [1], [0, 0, 1, 1], [], []>} : vector<256x128xbf16>, vector<128x128xbf16>, vector<256x128xf32> -> vector<256x128xf32>
    %c0_4 = arith.constant 0 : index
    %c0_5 = arith.constant 0 : index
    %4 = vector.load %arg3[%c0_4, %c0_5] : memref<1x128xf32, #tpu.memory_space<vmem>>, vector<1x128xf32>
    %5 = vector.broadcast %4 : vector<1x128xf32> to vector<256x128xf32>
    %6 = arith.addf %3, %5 : vector<256x128xf32>
    %7 = arith.negf %6 : vector<256x128xf32>
    %8 = math.exp %7 : vector<256x128xf32>
    %cst_6 = arith.constant 1.000000e+00 : f32
    %9 = vector.broadcast %cst_6 : f32 to vector<256x128xf32>
    %10 = arith.addf %9, %8 : vector<256x128xf32>
    %11 = arith.divf %9, %10 : vector<256x128xf32>
    %12 = arith.mulf %6, %11 : vector<256x128xf32>
    %cst_7 = arith.constant 1.676800e+00 : f32
    %13 = vector.broadcast %cst_7 : f32 to vector<256x128xf32>
    %14 = arith.mulf %12, %13 : vector<256x128xf32>
    %cst_8 = arith.constant 0.000000e+00 : f32
    %15 = vector.broadcast %cst_8 : f32 to vector<18x18x128xf32>
    %c0_9 = arith.constant 0 : index
    %c0_10 = arith.constant 0 : index
    %c0_11 = arith.constant 0 : index
    %16 = vector.load %arg7[%c0_9, %c0_10, %c0_11] : memref<18x18x128xf32, #tpu.memory_space<vmem>>, vector<18x18x128xf32>
    tpu.vector_store %arg7[%c0_9, %c0_10, %c0_11], %15 {strides = array<i32>} : memref<18x18x128xf32, #tpu.memory_space<vmem>>, vector<18x18x128xf32>,
    %17 = vector.extract_strided_slice %14 {offsets = [0, 0], sizes = [16, 128], strides = [1, 1]} : vector<256x128xf32> to vector<16x128xf32>
    %c1 = arith.constant 1 : index
    %c1_12 = arith.constant 1 : index
    %c0_13 = arith.constant 0 : index
    %18 = vector.load %arg7[%c1, %c1_12, %c0_13] : memref<18x18x128xf32, #tpu.memory_space<vmem>>, vector<1x16x128xf32>
    %19 = vector.shape_cast %18 : vector<1x16x128xf32> to vector<16x128xf32>
    %20 = vector.shape_cast %17 : vector<16x128xf32> to vector<1x16x128xf32>
    tpu.vector_store %arg7[%c1, %c1_12, %c0_13], %20 {strides = array<i32>} : memref<18x18x128xf32, #tpu.memory_space<vmem>>, vector<1x16x128xf32>,
    %21 = vector.extract_strided_slice %14 {offsets = [16, 0], sizes = [16, 128], strides = [1, 1]} : vector<256x128xf32> to vector<16x128xf32>
    %c2 = arith.constant 2 : index
    %c1_14 = arith.constant 1 : index
    %c0_15 = arith.constant 0 : index
    %22 = vector.load %arg7[%c2, %c1_14, %c0_15] : memref<18x18x128xf32, #tpu.memory_space<vmem>>, vector<1x16x128xf32>
    %23 = vector.shape_cast %22 : vector<1x16x128xf32> to vector<16x128xf32>
    %24 = vector.shape_cast %21 : vector<16x128xf32> to vector<1x16x128xf32>
    tpu.vector_store %arg7[%c2, %c1_14, %c0_15], %24 {strides = array<i32>} : memref<18x18x128xf32, #tpu.memory_space<vmem>>, vector<1x16x128xf32>,
    %25 = vector.extract_strided_slice %14 {offsets = [32, 0], sizes = [16, 128], strides = [1, 1]} : vector<256x128xf32> to vector<16x128xf32>
    %c3 = arith.constant 3 : index
    %c1_16 = arith.constant 1 : index
    %c0_17 = arith.constant 0 : index
    %26 = vector.load %arg7[%c3, %c1_16, %c0_17] : memref<18x18x128xf32, #tpu.memory_space<vmem>>, vector<1x16x128xf32>
    %27 = vector.shape_cast %26 : vector<1x16x128xf32> to vector<16x128xf32>
    %28 = vector.shape_cast %25 : vector<16x128xf32> to vector<1x16x128xf32>
    tpu.vector_store %arg7[%c3, %c1_16, %c0_17], %28 {strides = array<i32>} : memref<18x18x128xf32, #tpu.memory_space<vmem>>, vector<1x16x128xf32>,
    %29 = vector.extract_strided_slice %14 {offsets = [48, 0], sizes = [16, 128], strides = [1, 1]} : vector<256x128xf32> to vector<16x128xf32>
    %c4 = arith.constant 4 : index
    %c1_18 = arith.constant 1 : index
    %c0_19 = arith.constant 0 : index
    %30 = vector.load %arg7[%c4, %c1_18, %c0_19] : memref<18x18x128xf32, #tpu.memory_space<vmem>>, vector<1x16x128xf32>
    %31 = vector.shape_cast %30 : vector<1x16x128xf32> to vector<16x128xf32>
    %32 = vector.shape_cast %29 : vector<16x128xf32> to vector<1x16x128xf32>
    tpu.vector_store %arg7[%c4, %c1_18, %c0_19], %32 {strides = array<i32>} : memref<18x18x128xf32, #tpu.memory_space<vmem>>, vector<1x16x128xf32>,
    %33 = vector.extract_strided_slice %14 {offsets = [64, 0], sizes = [16, 128], strides = [1, 1]} : vector<256x128xf32> to vector<16x128xf32>
    %c5 = arith.constant 5 : index
    %c1_20 = arith.constant 1 : index
    %c0_21 = arith.constant 0 : index
    %34 = vector.load %arg7[%c5, %c1_20, %c0_21] : memref<18x18x128xf32, #tpu.memory_space<vmem>>, vector<1x16x128xf32>
    %35 = vector.shape_cast %34 : vector<1x16x128xf32> to vector<16x128xf32>
    %36 = vector.shape_cast %33 : vector<16x128xf32> to vector<1x16x128xf32>
    tpu.vector_store %arg7[%c5, %c1_20, %c0_21], %36 {strides = array<i32>} : memref<18x18x128xf32, #tpu.memory_space<vmem>>, vector<1x16x128xf32>,
    %37 = vector.extract_strided_slice %14 {offsets = [80, 0], sizes = [16, 128], strides = [1, 1]} : vector<256x128xf32> to vector<16x128xf32>
    %c6 = arith.constant 6 : index
    %c1_22 = arith.constant 1 : index
    %c0_23 = arith.constant 0 : index
    %38 = vector.load %arg7[%c6, %c1_22, %c0_23] : memref<18x18x128xf32, #tpu.memory_space<vmem>>, vector<1x16x128xf32>
    %39 = vector.shape_cast %38 : vector<1x16x128xf32> to vector<16x128xf32>
    %40 = vector.shape_cast %37 : vector<16x128xf32> to vector<1x16x128xf32>
    tpu.vector_store %arg7[%c6, %c1_22, %c0_23], %40 {strides = array<i32>} : memref<18x18x128xf32, #tpu.memory_space<vmem>>, vector<1x16x128xf32>,
    %41 = vector.extract_strided_slice %14 {offsets = [96, 0], sizes = [16, 128], strides = [1, 1]} : vector<256x128xf32> to vector<16x128xf32>
    %c7 = arith.constant 7 : index
    %c1_24 = arith.constant 1 : index
    %c0_25 = arith.constant 0 : index
    %42 = vector.load %arg7[%c7, %c1_24, %c0_25] : memref<18x18x128xf32, #tpu.memory_space<vmem>>, vector<1x16x128xf32>
    %43 = vector.shape_cast %42 : vector<1x16x128xf32> to vector<16x128xf32>
    %44 = vector.shape_cast %41 : vector<16x128xf32> to vector<1x16x128xf32>
    tpu.vector_store %arg7[%c7, %c1_24, %c0_25], %44 {strides = array<i32>} : memref<18x18x128xf32, #tpu.memory_space<vmem>>, vector<1x16x128xf32>,
    %45 = vector.extract_strided_slice %14 {offsets = [112, 0], sizes = [16, 128], strides = [1, 1]} : vector<256x128xf32> to vector<16x128xf32>
    %c8 = arith.constant 8 : index
    %c1_26 = arith.constant 1 : index
    %c0_27 = arith.constant 0 : index
    %46 = vector.load %arg7[%c8, %c1_26, %c0_27] : memref<18x18x128xf32, #tpu.memory_space<vmem>>, vector<1x16x128xf32>
    %47 = vector.shape_cast %46 : vector<1x16x128xf32> to vector<16x128xf32>
    %48 = vector.shape_cast %45 : vector<16x128xf32> to vector<1x16x128xf32>
    tpu.vector_store %arg7[%c8, %c1_26, %c0_27], %48 {strides = array<i32>} : memref<18x18x128xf32, #tpu.memory_space<vmem>>, vector<1x16x128xf32>,
    %49 = vector.extract_strided_slice %14 {offsets = [128, 0], sizes = [16, 128], strides = [1, 1]} : vector<256x128xf32> to vector<16x128xf32>
    %c9 = arith.constant 9 : index
    %c1_28 = arith.constant 1 : index
    %c0_29 = arith.constant 0 : index
    %50 = vector.load %arg7[%c9, %c1_28, %c0_29] : memref<18x18x128xf32, #tpu.memory_space<vmem>>, vector<1x16x128xf32>
    %51 = vector.shape_cast %50 : vector<1x16x128xf32> to vector<16x128xf32>
    %52 = vector.shape_cast %49 : vector<16x128xf32> to vector<1x16x128xf32>
    tpu.vector_store %arg7[%c9, %c1_28, %c0_29], %52 {strides = array<i32>} : memref<18x18x128xf32, #tpu.memory_space<vmem>>, vector<1x16x128xf32>,
    %53 = vector.extract_strided_slice %14 {offsets = [144, 0], sizes = [16, 128], strides = [1, 1]} : vector<256x128xf32> to vector<16x128xf32>
    %c10 = arith.constant 10 : index
    %c1_30 = arith.constant 1 : index
    %c0_31 = arith.constant 0 : index
    %54 = vector.load %arg7[%c10, %c1_30, %c0_31] : memref<18x18x128xf32, #tpu.memory_space<vmem>>, vector<1x16x128xf32>
    %55 = vector.shape_cast %54 : vector<1x16x128xf32> to vector<16x128xf32>
    %56 = vector.shape_cast %53 : vector<16x128xf32> to vector<1x16x128xf32>
    tpu.vector_store %arg7[%c10, %c1_30, %c0_31], %56 {strides = array<i32>} : memref<18x18x128xf32, #tpu.memory_space<vmem>>, vector<1x16x128xf32>,
    %57 = vector.extract_strided_slice %14 {offsets = [160, 0], sizes = [16, 128], strides = [1, 1]} : vector<256x128xf32> to vector<16x128xf32>
    %c11 = arith.constant 11 : index
    %c1_32 = arith.constant 1 : index
    %c0_33 = arith.constant 0 : index
    %58 = vector.load %arg7[%c11, %c1_32, %c0_33] : memref<18x18x128xf32, #tpu.memory_space<vmem>>, vector<1x16x128xf32>
    %59 = vector.shape_cast %58 : vector<1x16x128xf32> to vector<16x128xf32>
    %60 = vector.shape_cast %57 : vector<16x128xf32> to vector<1x16x128xf32>
    tpu.vector_store %arg7[%c11, %c1_32, %c0_33], %60 {strides = array<i32>} : memref<18x18x128xf32, #tpu.memory_space<vmem>>, vector<1x16x128xf32>,
    %61 = vector.extract_strided_slice %14 {offsets = [176, 0], sizes = [16, 128], strides = [1, 1]} : vector<256x128xf32> to vector<16x128xf32>
    %c12 = arith.constant 12 : index
    %c1_34 = arith.constant 1 : index
    %c0_35 = arith.constant 0 : index
    %62 = vector.load %arg7[%c12, %c1_34, %c0_35] : memref<18x18x128xf32, #tpu.memory_space<vmem>>, vector<1x16x128xf32>
    %63 = vector.shape_cast %62 : vector<1x16x128xf32> to vector<16x128xf32>
    %64 = vector.shape_cast %61 : vector<16x128xf32> to vector<1x16x128xf32>
    tpu.vector_store %arg7[%c12, %c1_34, %c0_35], %64 {strides = array<i32>} : memref<18x18x128xf32, #tpu.memory_space<vmem>>, vector<1x16x128xf32>,
    %65 = vector.extract_strided_slice %14 {offsets = [192, 0], sizes = [16, 128], strides = [1, 1]} : vector<256x128xf32> to vector<16x128xf32>
    %c13 = arith.constant 13 : index
    %c1_36 = arith.constant 1 : index
    %c0_37 = arith.constant 0 : index
    %66 = vector.load %arg7[%c13, %c1_36, %c0_37] : memref<18x18x128xf32, #tpu.memory_space<vmem>>, vector<1x16x128xf32>
    %67 = vector.shape_cast %66 : vector<1x16x128xf32> to vector<16x128xf32>
    %68 = vector.shape_cast %65 : vector<16x128xf32> to vector<1x16x128xf32>
    tpu.vector_store %arg7[%c13, %c1_36, %c0_37], %68 {strides = array<i32>} : memref<18x18x128xf32, #tpu.memory_space<vmem>>, vector<1x16x128xf32>,
    %69 = vector.extract_strided_slice %14 {offsets = [208, 0], sizes = [16, 128], strides = [1, 1]} : vector<256x128xf32> to vector<16x128xf32>
    %c14 = arith.constant 14 : index
    %c1_38 = arith.constant 1 : index
    %c0_39 = arith.constant 0 : index
    %70 = vector.load %arg7[%c14, %c1_38, %c0_39] : memref<18x18x128xf32, #tpu.memory_space<vmem>>, vector<1x16x128xf32>
    %71 = vector.shape_cast %70 : vector<1x16x128xf32> to vector<16x128xf32>
    %72 = vector.shape_cast %69 : vector<16x128xf32> to vector<1x16x128xf32>
    tpu.vector_store %arg7[%c14, %c1_38, %c0_39], %72 {strides = array<i32>} : memref<18x18x128xf32, #tpu.memory_space<vmem>>, vector<1x16x128xf32>,
    %73 = vector.extract_strided_slice %14 {offsets = [224, 0], sizes = [16, 128], strides = [1, 1]} : vector<256x128xf32> to vector<16x128xf32>
    %c15 = arith.constant 15 : index
    %c1_40 = arith.constant 1 : index
    %c0_41 = arith.constant 0 : index
    %74 = vector.load %arg7[%c15, %c1_40, %c0_41] : memref<18x18x128xf32, #tpu.memory_space<vmem>>, vector<1x16x128xf32>
    %75 = vector.shape_cast %74 : vector<1x16x128xf32> to vector<16x128xf32>
    %76 = vector.shape_cast %73 : vector<16x128xf32> to vector<1x16x128xf32>
    tpu.vector_store %arg7[%c15, %c1_40, %c0_41], %76 {strides = array<i32>} : memref<18x18x128xf32, #tpu.memory_space<vmem>>, vector<1x16x128xf32>,
    %77 = vector.extract_strided_slice %14 {offsets = [240, 0], sizes = [16, 128], strides = [1, 1]} : vector<256x128xf32> to vector<16x128xf32>
    %c16 = arith.constant 16 : index
    %c1_42 = arith.constant 1 : index
    %c0_43 = arith.constant 0 : index
    %78 = vector.load %arg7[%c16, %c1_42, %c0_43] : memref<18x18x128xf32, #tpu.memory_space<vmem>>, vector<1x16x128xf32>
    %79 = vector.shape_cast %78 : vector<1x16x128xf32> to vector<16x128xf32>
    %80 = vector.shape_cast %77 : vector<16x128xf32> to vector<1x16x128xf32>
    tpu.vector_store %arg7[%c16, %c1_42, %c0_43], %80 {strides = array<i32>} : memref<18x18x128xf32, #tpu.memory_space<vmem>>, vector<1x16x128xf32>,
    %c0_44 = arith.constant 0 : index
    %c0_45 = arith.constant 0 : index
    %c0_46 = arith.constant 0 : index
    %81 = vector.load %arg7[%c0_44, %c0_45, %c0_46] : memref<18x18x128xf32, #tpu.memory_space<vmem>>, vector<18x18x128xf32>
    %cst_47 = arith.constant 0.000000e+00 : f32
    %82 = vector.broadcast %cst_47 : f32 to vector<16x16x128xf32>
    %83 = vector.extract_strided_slice %81 {offsets = [0, 0, 0], sizes = [16, 16, 128], strides = [1, 1, 1]} : vector<18x18x128xf32> to vector<16x16x128xf32>
    %c0_48 = arith.constant 0 : index
    %c0_49 = arith.constant 0 : index
    %84 = vector.load %arg4[%c0_48, %c0_49] : memref<9x128xf32, #tpu.memory_space<vmem>>, vector<1x128xf32>
    %85 = vector.shape_cast %84 : vector<1x128xf32> to vector<128xf32>
    %86 = vector.shape_cast %85 : vector<128xf32> to vector<1x1x128xf32>
    %87 = vector.broadcast %86 : vector<1x1x128xf32> to vector<16x16x128xf32>
    %88 = arith.mulf %83, %87 : vector<16x16x128xf32>
    %89 = arith.addf %82, %88 : vector<16x16x128xf32>
    %90 = vector.extract_strided_slice %81 {offsets = [0, 1, 0], sizes = [16, 16, 128], strides = [1, 1, 1]} : vector<18x18x128xf32> to vector<16x16x128xf32>
    %c1_50 = arith.constant 1 : index
    %c0_51 = arith.constant 0 : index
    %91 = vector.load %arg4[%c1_50, %c0_51] : memref<9x128xf32, #tpu.memory_space<vmem>>, vector<1x128xf32>
    %92 = vector.shape_cast %91 : vector<1x128xf32> to vector<128xf32>
    %93 = vector.shape_cast %92 : vector<128xf32> to vector<1x1x128xf32>
    %94 = vector.broadcast %93 : vector<1x1x128xf32> to vector<16x16x128xf32>
    %95 = arith.mulf %90, %94 : vector<16x16x128xf32>
    %96 = arith.addf %89, %95 : vector<16x16x128xf32>
    %97 = vector.extract_strided_slice %81 {offsets = [0, 2, 0], sizes = [16, 16, 128], strides = [1, 1, 1]} : vector<18x18x128xf32> to vector<16x16x128xf32>
    %c2_52 = arith.constant 2 : index
    %c0_53 = arith.constant 0 : index
    %98 = vector.load %arg4[%c2_52, %c0_53] : memref<9x128xf32, #tpu.memory_space<vmem>>, vector<1x128xf32>
    %99 = vector.shape_cast %98 : vector<1x128xf32> to vector<128xf32>
    %100 = vector.shape_cast %99 : vector<128xf32> to vector<1x1x128xf32>
    %101 = vector.broadcast %100 : vector<1x1x128xf32> to vector<16x16x128xf32>
    %102 = arith.mulf %97, %101 : vector<16x16x128xf32>
    %103 = arith.addf %96, %102 : vector<16x16x128xf32>
    %104 = vector.extract_strided_slice %81 {offsets = [1, 0, 0], sizes = [16, 16, 128], strides = [1, 1, 1]} : vector<18x18x128xf32> to vector<16x16x128xf32>
    %c3_54 = arith.constant 3 : index
    %c0_55 = arith.constant 0 : index
    %105 = vector.load %arg4[%c3_54, %c0_55] : memref<9x128xf32, #tpu.memory_space<vmem>>, vector<1x128xf32>
    %106 = vector.shape_cast %105 : vector<1x128xf32> to vector<128xf32>
    %107 = vector.shape_cast %106 : vector<128xf32> to vector<1x1x128xf32>
    %108 = vector.broadcast %107 : vector<1x1x128xf32> to vector<16x16x128xf32>
    %109 = arith.mulf %104, %108 : vector<16x16x128xf32>
    %110 = arith.addf %103, %109 : vector<16x16x128xf32>
    %111 = vector.extract_strided_slice %81 {offsets = [1, 1, 0], sizes = [16, 16, 128], strides = [1, 1, 1]} : vector<18x18x128xf32> to vector<16x16x128xf32>
    %c4_56 = arith.constant 4 : index
    %c0_57 = arith.constant 0 : index
    %112 = vector.load %arg4[%c4_56, %c0_57] : memref<9x128xf32, #tpu.memory_space<vmem>>, vector<1x128xf32>
    %113 = vector.shape_cast %112 : vector<1x128xf32> to vector<128xf32>
    %114 = vector.shape_cast %113 : vector<128xf32> to vector<1x1x128xf32>
    %115 = vector.broadcast %114 : vector<1x1x128xf32> to vector<16x16x128xf32>
    %116 = arith.mulf %111, %115 : vector<16x16x128xf32>
    %117 = arith.addf %110, %116 : vector<16x16x128xf32>
    %118 = vector.extract_strided_slice %81 {offsets = [1, 2, 0], sizes = [16, 16, 128], strides = [1, 1, 1]} : vector<18x18x128xf32> to vector<16x16x128xf32>
    %c5_58 = arith.constant 5 : index
    %c0_59 = arith.constant 0 : index
    %119 = vector.load %arg4[%c5_58, %c0_59] : memref<9x128xf32, #tpu.memory_space<vmem>>, vector<1x128xf32>
    %120 = vector.shape_cast %119 : vector<1x128xf32> to vector<128xf32>
    %121 = vector.shape_cast %120 : vector<128xf32> to vector<1x1x128xf32>
    %122 = vector.broadcast %121 : vector<1x1x128xf32> to vector<16x16x128xf32>
    %123 = arith.mulf %118, %122 : vector<16x16x128xf32>
    %124 = arith.addf %117, %123 : vector<16x16x128xf32>
    %125 = vector.extract_strided_slice %81 {offsets = [2, 0, 0], sizes = [16, 16, 128], strides = [1, 1, 1]} : vector<18x18x128xf32> to vector<16x16x128xf32>
    %c6_60 = arith.constant 6 : index
    %c0_61 = arith.constant 0 : index
    %126 = vector.load %arg4[%c6_60, %c0_61] : memref<9x128xf32, #tpu.memory_space<vmem>>, vector<1x128xf32>
    %127 = vector.shape_cast %126 : vector<1x128xf32> to vector<128xf32>
    %128 = vector.shape_cast %127 : vector<128xf32> to vector<1x1x128xf32>
    %129 = vector.broadcast %128 : vector<1x1x128xf32> to vector<16x16x128xf32>
    %130 = arith.mulf %125, %129 : vector<16x16x128xf32>
    %131 = arith.addf %124, %130 : vector<16x16x128xf32>
    %132 = vector.extract_strided_slice %81 {offsets = [2, 1, 0], sizes = [16, 16, 128], strides = [1, 1, 1]} : vector<18x18x128xf32> to vector<16x16x128xf32>
    %c7_62 = arith.constant 7 : index
    %c0_63 = arith.constant 0 : index
    %133 = vector.load %arg4[%c7_62, %c0_63] : memref<9x128xf32, #tpu.memory_space<vmem>>, vector<1x128xf32>
    %134 = vector.shape_cast %133 : vector<1x128xf32> to vector<128xf32>
    %135 = vector.shape_cast %134 : vector<128xf32> to vector<1x1x128xf32>
    %136 = vector.broadcast %135 : vector<1x1x128xf32> to vector<16x16x128xf32>
    %137 = arith.mulf %132, %136 : vector<16x16x128xf32>
    %138 = arith.addf %131, %137 : vector<16x16x128xf32>
    %139 = vector.extract_strided_slice %81 {offsets = [2, 2, 0], sizes = [16, 16, 128], strides = [1, 1, 1]} : vector<18x18x128xf32> to vector<16x16x128xf32>
    %c8_64 = arith.constant 8 : index
    %c0_65 = arith.constant 0 : index
    %140 = vector.load %arg4[%c8_64, %c0_65] : memref<9x128xf32, #tpu.memory_space<vmem>>, vector<1x128xf32>
    %141 = vector.shape_cast %140 : vector<1x128xf32> to vector<128xf32>
    %142 = vector.shape_cast %141 : vector<128xf32> to vector<1x1x128xf32>
    %143 = vector.broadcast %142 : vector<1x1x128xf32> to vector<16x16x128xf32>
    %144 = arith.mulf %139, %143 : vector<16x16x128xf32>
    %145 = arith.addf %138, %144 : vector<16x16x128xf32>
    %c0_66 = arith.constant 0 : index
    %c0_67 = arith.constant 0 : index
    %146 = vector.load %arg5[%c0_66, %c0_67] : memref<1x128xf32, #tpu.memory_space<vmem>>, vector<1x128xf32>
    %147 = vector.shape_cast %146 : vector<1x128xf32> to vector<1x1x128xf32>
    %148 = vector.broadcast %147 : vector<1x1x128xf32> to vector<16x16x128xf32>
    %149 = arith.addf %145, %148 : vector<16x16x128xf32>
    %150 = arith.negf %149 : vector<16x16x128xf32>
    %151 = math.exp %150 : vector<16x16x128xf32>
    %cst_68 = arith.constant 1.000000e+00 : f32
    %152 = vector.broadcast %cst_68 : f32 to vector<16x16x128xf32>
    %153 = arith.addf %152, %151 : vector<16x16x128xf32>
    %154 = arith.divf %152, %153 : vector<16x16x128xf32>
    %155 = arith.mulf %149, %154 : vector<16x16x128xf32>
    %cst_69 = arith.constant 1.676800e+00 : f32
    %156 = vector.broadcast %cst_69 : f32 to vector<16x16x128xf32>
    %157 = arith.mulf %155, %156 : vector<16x16x128xf32>
    %158 = arith.truncf %157 : vector<16x16x128xf32> to vector<16x16x128xbf16>
    %c0_70 = arith.constant 0 : index
    %c0_71 = arith.constant 0 : index
    %c0_72 = arith.constant 0 : index
    %c0_73 = arith.constant 0 : index
    %159 = vector.load %arg6[%c0_70, %c0_71, %c0_72, %c0_73] : memref<1x16x16x128xbf16, #tpu.memory_space<vmem>>, vector<1x16x16x128xbf16>
    %160 = vector.shape_cast %159 : vector<1x16x16x128xbf16> to vector<16x16x128xbf16>
    %161 = vector.shape_cast %158 : vector<16x16x128xbf16> to vector<1x16x16x128xbf16>
    tpu.vector_store %arg6[%c0_70, %c0_71, %c0_72, %c0_73], %161 {strides = array<i32>} : memref<1x16x16x128xbf16, #tpu.memory_space<vmem>>, vector<1x16x16x128xbf16>,
    return
  }
  func.func @transform_0(%arg0: i32) -> (i32, i32, i32) {
    %c0_i32 = arith.constant 0 : i32
    %c0_i32_0 = arith.constant 0 : i32
    %c0_i32_1 = arith.constant 0 : i32
    return %arg0, %c0_i32, %c0_i32_0 : i32, i32, i32
  }
  func.func @transform_1(%arg0: i32) -> (i32, i32) {
    %c0_i32 = arith.constant 0 : i32
    %c0_i32_0 = arith.constant 0 : i32
    %c0_i32_1 = arith.constant 0 : i32
    return %c0_i32, %c0_i32_0 : i32, i32
  }
  func.func @transform_2(%arg0: i32) -> (i32, i32) {
    %c0_i32 = arith.constant 0 : i32
    %c0_i32_0 = arith.constant 0 : i32
    %c0_i32_1 = arith.constant 0 : i32
    return %c0_i32, %c0_i32_0 : i32, i32
  }
  func.func @transform_3(%arg0: i32) -> (i32, i32) {
    %c0_i32 = arith.constant 0 : i32
    %c0_i32_0 = arith.constant 0 : i32
    %c0_i32_1 = arith.constant 0 : i32
    return %c0_i32, %c0_i32_0 : i32, i32
  }
  func.func @transform_4(%arg0: i32) -> (i32, i32) {
    %c0_i32 = arith.constant 0 : i32
    %c0_i32_0 = arith.constant 0 : i32
    %c0_i32_1 = arith.constant 0 : i32
    return %c0_i32, %c0_i32_0 : i32, i32
  }
  func.func @transform_5(%arg0: i32) -> (i32, i32, i32, i32) {
    %c0_i32 = arith.constant 0 : i32
    %c0_i32_0 = arith.constant 0 : i32
    %c0_i32_1 = arith.constant 0 : i32
    %c0_i32_2 = arith.constant 0 : i32
    return %arg0, %c0_i32, %c0_i32_0, %c0_i32_1 : i32, i32, i32, i32
  }
}

</mosaic_0001>

<llo_original>
// kernel: tpu_custom_call.1
$region0: #{tpu_custom_call.1}
  #allocation0 [shape = 'u32[]', space=smem, size = 0x4, offset = 0x4, fixed_abs, tag = 'smem constant byte address 0x4 - core index']
  #allocation1 [shape = 'u32[144,128]{1,0:T(1,128)}', space=vmem, size = 0x12000, scoped, tag = 'internal scratch']
  #allocation2 [shape = 'f32[18,18,128]{2,1,0:T(8,128)}', space=vmem, size = 0x36000, scoped, tag = 'scratch operand']
  %s0 = inlined_call_operand.hbm [shape: bf16[2,256,128], index: 0, kind: input, shape index: {}]
  %s1 = inlined_call_operand.hbm [shape: bf16[128,128], index: 1, kind: input, shape index: {}]
  %s2 = inlined_call_operand.vmem [shape: f32[1,128], index: 2, kind: input, shape index: {}]
  %s3 = inlined_call_operand.hbm [shape: f32[9,128], index: 3, kind: input, shape index: {}]
  %s4 = inlined_call_operand.vmem [shape: f32[1,128], index: 4, kind: input, shape index: {}]
  %s5 = inlined_call_operand.hbm [shape: bf16[2,16,16,128], index: 5, kind: output, shape index: {}]
  %s6 = sld [smem:[#allocation0]]
  $region65: #{tpu_custom_call.1} parent=0
    _
  %s8 = ssub.s32 1, %s6
  %s9 = scalar_select 0, %s8, %s6
  $region1: #{tpu_custom_call.1} parent=0
    #allocation3 [shape = 'u8[131072]{0}', space=vmem, size = 0x20000, scoped, tag = 'input window, operand 0']
    #allocation4 [shape = 's32[2]{0}', space=sflag, size = 0x8, scoped, tag = 'scoped memory for tpu_custom_call.1']
    #allocation5 [shape = 's32[2]{0}', space=sflag, size = 0x8, scoped, tag = 'scoped memory for tpu_custom_call.1']
    #allocation6 [shape = 'u8[32768]{0}', space=vmem, size = 0x8000, scoped, tag = 'input window, operand 1, single buffered']
    #allocation7 [shape = 's32[1]{0}', space=sflag, size = 0x4, scoped, tag = 'scoped memory for tpu_custom_call.1']
    #allocation8 [shape = 'u8[8192]{0}', space=vmem, size = 0x2000, scoped, tag = 'input window, operand 3, single buffered']
    #allocation9 [shape = 'u8[131072]{0}', space=vmem, size = 0x20000, scoped, tag = 'output window, operand 0']
    %10 = vsyncpa [#allocation4], 0
    %s11 = scalar_lea.sflag [#allocation4], 1
    %12 = vsyncpa %s11, 0
    %13 = vsyncpa [#allocation7], 0
    %14 = vsyncpa [#allocation5], 0
    %s15 = scalar_lea.sflag [#allocation5], 1
    %16 = vsyncpa %s15, 0
    loop: start=0, step=1, limit=4
    $region2: #{tpu_custom_call.1} parent=1 // loop_pre_header
      _
    $region3: #{tpu_custom_call.1} parent=1 // loop_header
      %s18 = sphi 0, %s22
      %p19 = scmp.ge.s32.totalorder %s18, 4
      %s28 = sphi 0, %s30
      %s31 = sphi 0, %s28
      %s32 = sphi 0, %s31
      %s48 = sphi 0, %s32
      %s52 = sphi 0, %s52
      %s54 = sphi 0, %s52
      %s55 = sphi 0, %s54
      %s69 = sphi 0, %s55
      %s73 = sphi 0, %s73
      %s75 = sphi 0, %s73
      %s76 = sphi 0, %s75
      %s90 = sphi 0, %s76
      %s94 = sphi 0, %s94
      %s96 = sphi 0, %s94
      %s97 = sphi 0, %s96
      %s111 = sphi 0, %s97
      %s115 = sphi 0, %s115
      %s117 = sphi 0, %s115
      %s118 = sphi 0, %s117
      %s132 = sphi 0, %s118
      %s138 = sphi 0, %s140
      %s141 = sphi 0, %s138
      %s142 = sphi 0, %s141
      %s158 = sphi 0, %s142
    $region4: #{tpu_custom_call.1} parent=1 // loop_header_branch
      %21 = sbr.rel (%p19) target = $region8
    $region5: #{tpu_custom_call.1} parent=1 // loop_body
      %s23 = ssub.s32 %s18, 1
      %s24 = ssub.s32 %s18, 2
      %s25 = sadd.s32 %s18, 1
      %s26 = ssub.s32 %s18, %s25
      %p27 = scmp.eq.s32.totalorder %s26, 0
      %s29 = sadd.s32 %s28, 1
      %s30 = scalar_select %p27, %s28, %s29
      %p33 = pneg %p27
      %p34 = scmp.eq.s32.totalorder %s18, 1
      %p35 = por %p33, %p34
      %p36 = scmp.ne.s32.totalorder %s28, %s31
      %p37 = scmp.eq.s32.totalorder %s18, 0
      %p38 = por %p36, %p37
      %p39 = scmp.ne.s32.totalorder %s28, %s31
      %p40 = scmp.eq.s32.totalorder %s23, 1
      %p41 = por %p39, %p40
      %p42 = scmp.ne.s32.totalorder %s31, %s32
      %p43 = scmp.eq.s32.totalorder %s23, 0
      %p44 = por %p42, %p43
      %p45 = scmp.ne.s32.totalorder %s31, %s32
      %p46 = scmp.eq.s32.totalorder %s24, 1
      %p47 = por %p45, %p46
      %p49 = scmp.ne.s32.totalorder %s32, %s48
      %p50 = scmp.eq.s32.totalorder %s24, 0
      %p51 = por %p49, %p50
      %s53 = sadd.s32 %s52, 1
      %p56 = scmp.eq.s32.totalorder %s18, 1
      %p57 = scmp.ne.s32.totalorder %s52, %s54
      %p58 = scmp.eq.s32.totalorder %s18, 0
      %p59 = por %p57, %p58
      %p60 = scmp.ne.s32.totalorder %s52, %s54
      %p61 = scmp.eq.s32.totalorder %s23, 1
      %p62 = por %p60, %p61
      %p63 = scmp.ne.s32.totalorder %s54, %s55
      %p64 = scmp.eq.s32.totalorder %s23, 0
      %p65 = por %p63, %p64
      %p66 = scmp.ne.s32.totalorder %s54, %s55
      %p67 = scmp.eq.s32.totalorder %s24, 1
      %p68 = por %p66, %p67
      %p70 = scmp.ne.s32.totalorder %s55, %s69
      %p71 = scmp.eq.s32.totalorder %s24, 0
      %p72 = por %p70, %p71
      %s74 = sadd.s32 %s73, 1
      %p77 = scmp.eq.s32.totalorder %s18, 1
      %p78 = scmp.ne.s32.totalorder %s73, %s75
      %p79 = scmp.eq.s32.totalorder %s18, 0
      %p80 = por %p78, %p79
      %p81 = scmp.ne.s32.totalorder %s73, %s75
      %p82 = scmp.eq.s32.totalorder %s23, 1
      %p83 = por %p81, %p82
      %p84 = scmp.ne.s32.totalorder %s75, %s76
      %p85 = scmp.eq.s32.totalorder %s23, 0
      %p86 = por %p84, %p85
      %p87 = scmp.ne.s32.totalorder %s75, %s76
      %p88 = scmp.eq.s32.totalorder %s24, 1
      %p89 = por %p87, %p88
      %p91 = scmp.ne.s32.totalorder %s76, %s90
      %p92 = scmp.eq.s32.totalorder %s24, 0
      %p93 = por %p91, %p92
      %s95 = sadd.s32 %s94, 1
      %p98 = scmp.eq.s32.totalorder %s18, 1
      %p99 = scmp.ne.s32.totalorder %s94, %s96
      %p100 = scmp.eq.s32.totalorder %s18, 0
      %p101 = por %p99, %p100
      %p102 = scmp.ne.s32.totalorder %s94, %s96
      %p103 = scmp.eq.s32.totalorder %s23, 1
      %p104 = por %p102, %p103
      %p105 = scmp.ne.s32.totalorder %s96, %s97
      %p106 = scmp.eq.s32.totalorder %s23, 0
      %p107 = por %p105, %p106
      %p108 = scmp.ne.s32.totalorder %s96, %s97
      %p109 = scmp.eq.s32.totalorder %s24, 1
      %p110 = por %p108, %p109
      %p112 = scmp.ne.s32.totalorder %s97, %s111
      %p113 = scmp.eq.s32.totalorder %s24, 0
      %p114 = por %p112, %p113
      %s116 = sadd.s32 %s115, 1
      %p119 = scmp.eq.s32.totalorder %s18, 1
      %p120 = scmp.ne.s32.totalorder %s115, %s117
      %p121 = scmp.eq.s32.totalorder %s18, 0
      %p122 = por %p120, %p121
      %p123 = scmp.ne.s32.totalorder %s115, %s117
      %p124 = scmp.eq.s32.totalorder %s23, 1
      %p125 = por %p123, %p124
      %p126 = scmp.ne.s32.totalorder %s117, %s118
      %p127 = scmp.eq.s32.totalorder %s23, 0
      %p128 = por %p126, %p127
      %p129 = scmp.ne.s32.totalorder %s117, %s118
      %p130 = scmp.eq.s32.totalorder %s24, 1
      %p131 = por %p129, %p130
      %p133 = scmp.ne.s32.totalorder %s118, %s132
      %p134 = scmp.eq.s32.totalorder %s24, 0
      %p135 = por %p133, %p134
      %s136 = ssub.s32 %s18, %s25
      %p137 = scmp.eq.s32.totalorder %s136, 0
      %s139 = sadd.s32 %s138, 1
      %s140 = scalar_select %p137, %s138, %s139
      %p143 = pneg %p137
      %p144 = scmp.eq.s32.totalorder %s18, 1
      %p145 = por %p143, %p144
      %p146 = scmp.ne.s32.totalorder %s138, %s141
      %p147 = scmp.eq.s32.totalorder %s18, 0
      %p148 = por %p146, %p147
      %p149 = scmp.ne.s32.totalorder %s138, %s141
      %p150 = scmp.eq.s32.totalorder %s23, 1
      %p151 = por %p149, %p150
      %p152 = scmp.ne.s32.totalorder %s141, %s142
      %p153 = scmp.eq.s32.totalorder %s23, 0
      %p154 = por %p152, %p153
      %p155 = scmp.ne.s32.totalorder %s141, %s142
      %p156 = scmp.eq.s32.totalorder %s24, 1
      %p157 = por %p155, %p156
      %p159 = scmp.ne.s32.totalorder %s142, %s158
      %p160 = scmp.eq.s32.totalorder %s24, 0
      %p161 = por %p159, %p160
      %p162 = scmp.le.s32.totalorder 1, %s18
      %p163 = scmp.lt.s32.totalorder %s18, 3
      %p164 = pnand %p162, %p163
      %p165 = pneg %p164
      // Predicated region
      $region9: #{tpu_custom_call.1} parent=5 // pred_check
        _
      $region10: #{tpu_custom_call.1} parent=5 // pred_check_branch
        %167 = sbr.rel (%p164) target = $region12
      $region11: #{tpu_custom_call.1} parent=5 // pred_region
        %s168 = ssub.s32 %s18, 1
        // Predicated region
        $region13: #{tpu_custom_call.1} parent=11 // pred_check
          %p169 = pneg %p65
        $region14: #{tpu_custom_call.1} parent=11 // pred_check_branch
          %171 = sbr.rel (%p169) target = $region16
        $region15: #{tpu_custom_call.1} parent=11 // pred_region
          %s173 = ssub.s32 1024, 1024
          %174 = vsyncadd [#allocation7], %s173
          %s175 = sshll.u32 [#allocation6], 4
          %s176 = int_to_ptr.vmem [resolvable:$true] %s175
          %181 = dma.hbm_to_vmem [thread:$0]  %s1, 1024, %s176, [#allocation7], 64, 64, 4
        $region16: #{tpu_custom_call.1} parent=11 // pred_fallthru
          _
        // Predicated region
        $region17: #{tpu_custom_call.1} parent=11 // pred_check
          %p182 = pneg %p86
        $region18: #{tpu_custom_call.1} parent=11 // pred_check_branch
          %184 = sbr.rel (%p182) target = $region20
        $region19: #{tpu_custom_call.1} parent=11 // pred_region
          _
        $region20: #{tpu_custom_call.1} parent=11 // pred_fallthru
          _
        // Predicated region
        $region21: #{tpu_custom_call.1} parent=11 // pred_check
          %p185 = pneg %p107
        $region22: #{tpu_custom_call.1} parent=11 // pred_check_branch
          %187 = sbr.rel (%p185) target = $region24
        $region23: #{tpu_custom_call.1} parent=11 // pred_region
          %s189 = ssub.s32 256, 256
          %190 = vsyncadd [#allocation7], %s189
          %s191 = sshll.u32 [#allocation8], 4
          %s192 = int_to_ptr.vmem [resolvable:$true] %s191
          %197 = dma.hbm_to_vmem [thread:$0]  %s3, 256, %s192, [#allocation7], 128, 128, 8
        $region24: #{tpu_custom_call.1} parent=11 // pred_fallthru
          _
        // Predicated region
        $region25: #{tpu_custom_call.1} parent=11 // pred_check
          %p198 = pneg %p128
        $region26: #{tpu_custom_call.1} parent=11 // pred_check_branch
          %200 = sbr.rel (%p198) target = $region28
        $region27: #{tpu_custom_call.1} parent=11 // pred_region
          _
        $region28: #{tpu_custom_call.1} parent=11 // pred_fallthru
          _
      $region12: #{tpu_custom_call.1} parent=5 // pred_fallthru
        _
      %p201 = scmp.lt.s32.totalorder %s18, 2
      // Predicated region
      $region29: #{tpu_custom_call.1} parent=5 // pred_check
        %p202 = pneg %p201
      $region30: #{tpu_custom_call.1} parent=5 // pred_check_branch
        %204 = sbr.rel (%p202) target = $region32
      $region31: #{tpu_custom_call.1} parent=5 // pred_region
        // Predicated region
        $region33: #{tpu_custom_call.1} parent=31 // pred_check
          %p205 = pneg %p38
        $region34: #{tpu_custom_call.1} parent=31 // pred_check_branch
          %207 = sbr.rel (%p205) target = $region36
        $region35: #{tpu_custom_call.1} parent=31 // pred_region
          %s208 = sand.u32 %s28, 1
          %s209 = scalar_lea.sflag [#allocation4], %s208
          %s210 = sand.u32 %s28, 1
          %s211 = smul.addr %s210, 128
          %s212 = scalar_lea.vmem [#allocation3], %s211
          %s214 = ssub.s32 2048, 2048
          %215 = vsyncadd %s209, %s214
          %s216 = smul.addr %s18, 32
          %s217 = smul.addr %s216, 64
          %s218 = scalar_lea.hbm %s0, %s217
          %s219 = sshll.u32 %s212, 4
          %s220 = int_to_ptr.vmem [resolvable:$true] %s219
          %225 = dma.hbm_to_vmem [thread:$0]  %s218, 2048, %s220, %s209, 64, 64, 4
        $region36: #{tpu_custom_call.1} parent=31 // pred_fallthru
          _
      $region32: #{tpu_custom_call.1} parent=5 // pred_fallthru
        _
      %p226 = scmp.le.s32.totalorder 1, %s18
      %p227 = scmp.lt.s32.totalorder %s18, 3
      %p228 = pnand %p226, %p227
      %p229 = pneg %p228
      // Predicated region
      $region37: #{tpu_custom_call.1} parent=5 // pred_check
        _
      $region38: #{tpu_custom_call.1} parent=5 // pred_check_branch
        %231 = sbr.rel (%p228) target = $region40
      $region39: #{tpu_custom_call.1} parent=5 // pred_region
        %s232 = ssub.s32 %s18, 1
        %s233 = sand.u32 %s31, 1
        %s234 = scalar_lea.sflag [#allocation4], %s233
        %s235 = sand.u32 %s31, 1
        %s236 = smul.addr %s235, 128
        %s237 = scalar_lea.vmem [#allocation3], %s236
        // Predicated region
        $region41: #{tpu_custom_call.1} parent=39 // pred_check
          %p238 = pneg %p44
        $region42: #{tpu_custom_call.1} parent=39 // pred_check_branch
          %240 = sbr.rel (%p238) target = $region44
        $region43: #{tpu_custom_call.1} parent=39 // pred_region
          %241 = dma.done %s234, 2048
        $region44: #{tpu_custom_call.1} parent=39 // pred_fallthru
          _
        // Predicated region
        $region45: #{tpu_custom_call.1} parent=39 // pred_check
          %p242 = pneg %p65
        $region46: #{tpu_custom_call.1} parent=39 // pred_check_branch
          %244 = sbr.rel (%p242) target = $region48
        $region47: #{tpu_custom_call.1} parent=39 // pred_region
          %245 = dma.done [#allocation7], 1024
        $region48: #{tpu_custom_call.1} parent=39 // pred_fallthru
          _
        // Predicated region
        $region49: #{tpu_custom_call.1} parent=39 // pred_check
          %p246 = pneg %p107
        $region50: #{tpu_custom_call.1} parent=39 // pred_check_branch
          %248 = sbr.rel (%p246) target = $region52
        $region51: #{tpu_custom_call.1} parent=39 // pred_region
          %249 = dma.done [#allocation7], 256
        $region52: #{tpu_custom_call.1} parent=39 // pred_fallthru
          _
        %s250 = sand.u32 %s31, 1
        %s251 = scalar_lea.sflag [#allocation4], %s250
        %s252 = sand.u32 %s31, 1
        %s253 = smul.addr %s252, 128
        %s254 = scalar_lea.vmem [#allocation3], %s253
        %p255 = pneg %p44
        %p256 = pneg %p41
        %p257 = pneg %p65
        %p258 = pneg %p62
        %p259 = pneg %p86
        %p260 = pneg %p83
        %p261 = pneg %p107
        %p262 = pneg %p104
        %p263 = pneg %p128
        %p264 = pneg %p125
        %p265 = pneg %p154
        %p266 = pneg %p151
        %s267 = sand.u32 %s141, 1
        %s268 = scalar_lea.sflag [#allocation5], %s267
        %s269 = sand.u32 %s141, 1
        %s270 = smul.addr %s269, 128
        %s271 = scalar_lea.vmem [#allocation9], %s270
        %v273 = vld [vmem:[%s237] sm:$0xf]
        %v274 = vld [vmem:[%s237 + $0x4] sm:$0xf]
        %v275 = vld [vmem:[%s237 + $0x8] sm:$0xf]
        %v276 = vld [vmem:[%s237 + $0xc] sm:$0xf]
        %v277 = vld [vmem:[%s237 + $0x10] sm:$0xf]
        %v278 = vld [vmem:[%s237 + $0x14] sm:$0xf]
        %v279 = vld [vmem:[%s237 + $0x18] sm:$0xf]
        %v280 = vld [vmem:[%s237 + $0x1c] sm:$0xf]
        %v281 = vld [vmem:[%s237 + $0x20] sm:$0xf]
        %v282 = vld [vmem:[%s237 + $0x24] sm:$0xf]
        %v283 = vld [vmem:[%s237 + $0x28] sm:$0xf]
        %v284 = vld [vmem:[%s237 + $0x2c] sm:$0xf]
        %v285 = vld [vmem:[%s237 + $0x30] sm:$0xf]
        %v286 = vld [vmem:[%s237 + $0x34] sm:$0xf]
        %v287 = vld [vmem:[%s237 + $0x38] sm:$0xf]
        %v288 = vld [vmem:[%s237 + $0x3c] sm:$0xf]
        %v289 = vld [vmem:[%s237 + $0x40] sm:$0xf]
        %v290 = vld [vmem:[%s237 + $0x44] sm:$0xf]
        %v291 = vld [vmem:[%s237 + $0x48] sm:$0xf]
        %v292 = vld [vmem:[%s237 + $0x4c] sm:$0xf]
        %v293 = vld [vmem:[%s237 + $0x50] sm:$0xf]
        %v294 = vld [vmem:[%s237 + $0x54] sm:$0xf]
        %v295 = vld [vmem:[%s237 + $0x58] sm:$0xf]
        %v296 = vld [vmem:[%s237 + $0x5c] sm:$0xf]
        %v297 = vld [vmem:[%s237 + $0x60] sm:$0xf]
        %v298 = vld [vmem:[%s237 + $0x64] sm:$0xf]
        %v299 = vld [vmem:[%s237 + $0x68] sm:$0xf]
        %v300 = vld [vmem:[%s237 + $0x6c] sm:$0xf]
        %v301 = vld [vmem:[%s237 + $0x70] sm:$0xf]
        %v302 = vld [vmem:[%s237 + $0x74] sm:$0xf]
        %v303 = vld [vmem:[%s237 + $0x78] sm:$0xf]
        %v304 = vld [vmem:[%s237 + $0x7c] sm:$0xf]
        %v305 = vld [vmem:[#allocation6] sm:$0xf]
        %v306 = vld [vmem:[#allocation6 + $0x4] sm:$0xf]
        %v307 = vld [vmem:[#allocation6 + $0x8] sm:$0xf]
        %v308 = vld [vmem:[#allocation6 + $0xc] sm:$0xf]
        %v309 = vld [vmem:[#allocation6 + $0x10] sm:$0xf]
        %v310 = vld [vmem:[#allocation6 + $0x14] sm:$0xf]
        %v311 = vld [vmem:[#allocation6 + $0x18] sm:$0xf]
        %v312 = vld [vmem:[#allocation6 + $0x1c] sm:$0xf]
        %v313 = vld [vmem:[#allocation6 + $0x20] sm:$0xf]
        %v314 = vld [vmem:[#allocation6 + $0x24] sm:$0xf]
        %v315 = vld [vmem:[#allocation6 + $0x28] sm:$0xf]
        %v316 = vld [vmem:[#allocation6 + $0x2c] sm:$0xf]
        %v317 = vld [vmem:[#allocation6 + $0x30] sm:$0xf]
        %v318 = vld [vmem:[#allocation6 + $0x34] sm:$0xf]
        %v319 = vld [vmem:[#allocation6 + $0x38] sm:$0xf]
        %v320 = vld [vmem:[#allocation6 + $0x3c] sm:$0xf]
        %v321 = vld [vmem:[%s2] sm:$0x1]
        %v323 = vlaneseq
        %v324 = vshrl.u32 %v323, 7
        %v325 = vsub.s32 0, %v324
        %v326 = vrot.slane %v321, %v325
        %v360 = vunpack.c.l.b16 %v273
        %v361 = vunpack.c.l.b16 %v274
        %v362 = vunpack.c.l.b16 %v275
        %v363 = vunpack.c.l.b16 %v276
        %v364 = vunpack.c.l.b16 %v277
        %v365 = vunpack.c.l.b16 %v278
        %v366 = vunpack.c.l.b16 %v279
        %v367 = vunpack.c.l.b16 %v280
        %v368 = vunpack.c.l.b16 %v281
        %v369 = vunpack.c.l.b16 %v282
        %v370 = vunpack.c.l.b16 %v283
        %v371 = vunpack.c.l.b16 %v284
        %v372 = vunpack.c.l.b16 %v285
        %v373 = vunpack.c.l.b16 %v286
        %v374 = vunpack.c.l.b16 %v287
        %v375 = vunpack.c.l.b16 %v288
        %v376 = vunpack.c.l.b16 %v289
        %v377 = vunpack.c.l.b16 %v290
        %v378 = vunpack.c.l.b16 %v291
        %v379 = vunpack.c.l.b16 %v292
        %v380 = vunpack.c.l.b16 %v293
        %v381 = vunpack.c.l.b16 %v294
        %v382 = vunpack.c.l.b16 %v295
        %v383 = vunpack.c.l.b16 %v296
        %v384 = vunpack.c.l.b16 %v297
        %v385 = vunpack.c.l.b16 %v298
        %v386 = vunpack.c.l.b16 %v299
        %v387 = vunpack.c.l.b16 %v300
        %v388 = vunpack.c.l.b16 %v301
        %v389 = vunpack.c.l.b16 %v302
        %v390 = vunpack.c.l.b16 %v303
        %v391 = vunpack.c.l.b16 %v304
        %v392 = vpack.c.b16 %v361, %v360
        %v393 = vpack.c.b16 %v363, %v362
        %v394 = vpack.c.b16 %v365, %v364
        %v395 = vpack.c.b16 %v367, %v366
        %v396 = vpack.c.b16 %v369, %v368
        %v397 = vpack.c.b16 %v371, %v370
        %v398 = vpack.c.b16 %v373, %v372
        %v399 = vpack.c.b16 %v375, %v374
        %v400 = vpack.c.b16 %v377, %v376
        %v401 = vpack.c.b16 %v379, %v378
        %v402 = vpack.c.b16 %v381, %v380
        %v403 = vpack.c.b16 %v383, %v382
        %v404 = vpack.c.b16 %v385, %v384
        %v405 = vpack.c.b16 %v387, %v386
        %v406 = vpack.c.b16 %v389, %v388
        %v407 = vpack.c.b16 %v391, %v390
        %v440 = vunpack.c.l.b16 %v305
        %v441 = vunpack.c.l.b16 %v306
        %v442 = vunpack.c.l.b16 %v307
        %v443 = vunpack.c.l.b16 %v308
        %v444 = vunpack.c.l.b16 %v309
        %v445 = vunpack.c.l.b16 %v310
        %v446 = vunpack.c.l.b16 %v311
        %v447 = vunpack.c.l.b16 %v312
        %v448 = vunpack.c.l.b16 %v313
        %v449 = vunpack.c.l.b16 %v314
        %v450 = vunpack.c.l.b16 %v315
        %v451 = vunpack.c.l.b16 %v316
        %v452 = vunpack.c.l.b16 %v317
        %v453 = vunpack.c.l.b16 %v318
        %v454 = vunpack.c.l.b16 %v319
        %v455 = vunpack.c.l.b16 %v320
        %v456 = vpack.c.b16 %v441, %v440
        %v457 = vpack.c.b16 %v443, %v442
        %v458 = vpack.c.b16 %v445, %v444
        %v459 = vpack.c.b16 %v447, %v446
        %v460 = vpack.c.b16 %v449, %v448
        %v461 = vpack.c.b16 %v451, %v450
        %v462 = vpack.c.b16 %v453, %v452
        %v463 = vpack.c.b16 %v455, %v454
        %472 = vmatprep.subr.bf16.mxu0 0
        %473 = vmatpush1.bf16.msra.mxu0 %v456
        %474 = vmatprep.subr.bf16.mxu0 0
        %475 = vmatpush1.bf16.msra.mxu0 %v457
        %476 = vmatprep.subr.bf16.mxu0 0
        %477 = vmatpush1.bf16.msra.mxu0 %v458
        %478 = vmatprep.subr.bf16.mxu0 0
        %479 = vmatpush1.bf16.msra.mxu0 %v459
        %480 = vmatprep.subr.bf16.mxu0 0
        %481 = vmatpush1.bf16.msra.mxu0 %v460
        %482 = vmatprep.subr.bf16.mxu0 0
        %483 = vmatpush1.bf16.msra.mxu0 %v461
        %484 = vmatprep.subr.bf16.mxu0 0
        %485 = vmatpush1.bf16.msra.mxu0 %v462
        %486 = vmatprep.subr.bf16.mxu0 0
        %487 = vmatpush1.bf16.msra.mxu0 %v463
        %488 = vmatprep.subr.bf16.mxu0 0
        %489 = vmatpush1.bf16.msra.mxu0 0
        %490 = vmatprep.subr.bf16.mxu0 0
        %491 = vmatpush1.bf16.msra.mxu0 0
        %492 = vmatprep.subr.bf16.mxu0 0
        %493 = vmatpush1.bf16.msra.mxu0 0
        %494 = vmatprep.subr.bf16.mxu0 0
        %495 = vmatpush1.bf16.msra.mxu0 0
        %496 = vmatprep.subr.bf16.mxu0 0
        %497 = vmatpush1.bf16.msra.mxu0 0
        %498 = vmatprep.subr.bf16.mxu0 0
        %499 = vmatpush1.bf16.msra.mxu0 0
        %500 = vmatprep.subr.bf16.mxu0 0
        %501 = vmatpush1.bf16.msra.mxu0 0
        %502 = vmatprep.subr.bf16.mxu0 0
        %503 = vmatpush1.bf16.msra.mxu0 0
        %504 = vmatprep.mubr.bf16.mxu0 0
        %505 = vmatmul.mubr.bf16.gmra.mrb[0].mxu0 %v392
        %v506 = vpop.f32.mrb[0].mxu0
        %v507 = vadd.f32 %v326, %v506
        %v508 = vpop.f32.mrb[0].mxu0
        %v509 = vpop.f32.mrb[0].mxu0
        %v510 = vadd.f32 %v326, %v509
        %v511 = vpop.f32.mrb[0].mxu0
        %512 = vmatprep.mubr.bf16.mxu0 0
        %513 = vmatmul.mubr.bf16.gmra.mrb[0].mxu0 %v393
        %v514 = vpop.f32.mrb[0].mxu0
        %v515 = vadd.f32 %v326, %v514
        %v516 = vpop.f32.mrb[0].mxu0
        %v517 = vpop.f32.mrb[0].mxu0
        %v518 = vadd.f32 %v326, %v517
        %v519 = vpop.f32.mrb[0].mxu0
        %520 = vmatprep.mubr.bf16.mxu0 0
        %521 = vmatmul.mubr.bf16.gmra.mrb[0].mxu0 %v394
        %v522 = vpop.f32.mrb[0].mxu0
        %v523 = vadd.f32 %v326, %v522
        %v524 = vpop.f32.mrb[0].mxu0
        %v525 = vpop.f32.mrb[0].mxu0
        %v526 = vadd.f32 %v326, %v525
        %v527 = vpop.f32.mrb[0].mxu0
        %528 = vmatprep.mubr.bf16.mxu0 0
        %529 = vmatmul.mubr.bf16.gmra.mrb[0].mxu0 %v395
        %v530 = vpop.f32.mrb[0].mxu0
        %v531 = vadd.f32 %v326, %v530
        %v532 = vpop.f32.mrb[0].mxu0
        %v533 = vpop.f32.mrb[0].mxu0
        %v534 = vadd.f32 %v326, %v533
        %v535 = vpop.f32.mrb[0].mxu0
        %536 = vmatprep.mubr.bf16.mxu0 0
        %537 = vmatmul.mubr.bf16.gmra.mrb[0].mxu0 %v396
        %v538 = vpop.f32.mrb[0].mxu0
        %v539 = vadd.f32 %v326, %v538
        %v540 = vpop.f32.mrb[0].mxu0
        %v541 = vpop.f32.mrb[0].mxu0
        %v542 = vadd.f32 %v326, %v541
        %v543 = vpop.f32.mrb[0].mxu0
        %544 = vmatprep.mubr.bf16.mxu0 0
        %545 = vmatmul.mubr.bf16.gmra.mrb[0].mxu0 %v397
        %v546 = vpop.f32.mrb[0].mxu0
        %v547 = vadd.f32 %v326, %v546
        %v548 = vpop.f32.mrb[0].mxu0
        %v549 = vpop.f32.mrb[0].mxu0
        %v550 = vadd.f32 %v326, %v549
        %v551 = vpop.f32.mrb[0].mxu0
        %552 = vmatprep.mubr.bf16.mxu0 0
        %553 = vmatmul.mubr.bf16.gmra.mrb[0].mxu0 %v398
        %v554 = vpop.f32.mrb[0].mxu0
        %v555 = vadd.f32 %v326, %v554
        %v556 = vpop.f32.mrb[0].mxu0
        %v557 = vpop.f32.mrb[0].mxu0
        %v558 = vadd.f32 %v326, %v557
        %v559 = vpop.f32.mrb[0].mxu0
        %560 = vmatprep.mubr.bf16.mxu0 0
        %561 = vmatmul.mubr.bf16.gmra.mrb[0].mxu0 %v399
        %v562 = vpop.f32.mrb[0].mxu0
        %v563 = vadd.f32 %v326, %v562
        %v564 = vpop.f32.mrb[0].mxu0
        %v565 = vpop.f32.mrb[0].mxu0
        %v566 = vadd.f32 %v326, %v565
        %v567 = vpop.f32.mrb[0].mxu0
        %568 = vmatprep.mubr.bf16.mxu0 0
        %569 = vmatmul.mubr.bf16.gmra.mrb[0].mxu0 %v400
        %v570 = vpop.f32.mrb[0].mxu0
        %v571 = vadd.f32 %v326, %v570
        %v572 = vpop.f32.mrb[0].mxu0
        %v573 = vpop.f32.mrb[0].mxu0
        %v574 = vadd.f32 %v326, %v573
        %v575 = vpop.f32.mrb[0].mxu0
        %576 = vmatprep.mubr.bf16.mxu0 0
        %577 = vmatmul.mubr.bf16.gmra.mrb[0].mxu0 %v401
        %v578 = vpop.f32.mrb[0].mxu0
        %v579 = vadd.f32 %v326, %v578
        %v580 = vpop.f32.mrb[0].mxu0
        %v581 = vpop.f32.mrb[0].mxu0
        %v582 = vadd.f32 %v326, %v581
        %v583 = vpop.f32.mrb[0].mxu0
        %584 = vmatprep.mubr.bf16.mxu0 0
        %585 = vmatmul.mubr.bf16.gmra.mrb[0].mxu0 %v402
        %v586 = vpop.f32.mrb[0].mxu0
        %v587 = vadd.f32 %v326, %v586
        %v588 = vpop.f32.mrb[0].mxu0
        %v589 = vpop.f32.mrb[0].mxu0
        %v590 = vadd.f32 %v326, %v589
        %v591 = vpop.f32.mrb[0].mxu0
        %592 = vmatprep.mubr.bf16.mxu0 0
        %593 = vmatmul.mubr.bf16.gmra.mrb[0].mxu0 %v403
        %v594 = vpop.f32.mrb[0].mxu0
        %v595 = vadd.f32 %v326, %v594
        %v596 = vpop.f32.mrb[0].mxu0
        %v597 = vpop.f32.mrb[0].mxu0
        %v598 = vadd.f32 %v326, %v597
        %v599 = vpop.f32.mrb[0].mxu0
        %600 = vmatprep.mubr.bf16.mxu0 0
        %601 = vmatmul.mubr.bf16.gmra.mrb[0].mxu0 %v404
        %v602 = vpop.f32.mrb[0].mxu0
        %v603 = vadd.f32 %v326, %v602
        %v604 = vpop.f32.mrb[0].mxu0
        %v605 = vpop.f32.mrb[0].mxu0
        %v606 = vadd.f32 %v326, %v605
        %v607 = vpop.f32.mrb[0].mxu0
        %608 = vmatprep.mubr.bf16.mxu0 0
        %609 = vmatmul.mubr.bf16.gmra.mrb[0].mxu0 %v405
        %v610 = vpop.f32.mrb[0].mxu0
        %v611 = vadd.f32 %v326, %v610
        %v612 = vpop.f32.mrb[0].mxu0
        %v613 = vpop.f32.mrb[0].mxu0
        %v614 = vadd.f32 %v326, %v613
        %v615 = vpop.f32.mrb[0].mxu0
        %616 = vmatprep.mubr.bf16.mxu0 0
        %617 = vmatmul.mubr.bf16.gmra.mrb[0].mxu0 %v406
        %v618 = vpop.f32.mrb[0].mxu0
        %v619 = vadd.f32 %v326, %v618
        %v620 = vpop.f32.mrb[0].mxu0
        %v621 = vpop.f32.mrb[0].mxu0
        %v622 = vadd.f32 %v326, %v621
        %v623 = vpop.f32.mrb[0].mxu0
        %624 = vmatprep.mubr.bf16.mxu0 0
        %625 = vmatmul.mubr.bf16.gmra.mrb[0].mxu0 %v407
        %v626 = vpop.f32.mrb[0].mxu0
        %v627 = vadd.f32 %v326, %v626
        %v628 = vpop.f32.mrb[0].mxu0
        %v629 = vpop.f32.mrb[0].mxu0
        %v630 = vadd.f32 %v326, %v629
        %v631 = vpop.f32.mrb[0].mxu0
        %632 = vdwg.mxu0
        %v633 = vxor.u32 %v507, 2147483648
        %v634 = vxor.u32 %v510, 2147483648
        %v635 = vxor.u32 %v515, 2147483648
        %v636 = vxor.u32 %v518, 2147483648
        %v637 = vxor.u32 %v523, 2147483648
        %v638 = vxor.u32 %v526, 2147483648
        %v639 = vxor.u32 %v531, 2147483648
        %v640 = vxor.u32 %v534, 2147483648
        %v641 = vxor.u32 %v539, 2147483648
        %v642 = vxor.u32 %v542, 2147483648
        %v643 = vxor.u32 %v547, 2147483648
        %v644 = vxor.u32 %v550, 2147483648
        %v645 = vxor.u32 %v555, 2147483648
        %v646 = vxor.u32 %v558, 2147483648
        %v647 = vxor.u32 %v563, 2147483648
        %v648 = vxor.u32 %v566, 2147483648
        %v649 = vxor.u32 %v571, 2147483648
        %v650 = vxor.u32 %v574, 2147483648
        %v651 = vxor.u32 %v579, 2147483648
        %v652 = vxor.u32 %v582, 2147483648
        %v653 = vxor.u32 %v587, 2147483648
        %v654 = vxor.u32 %v590, 2147483648
        %v655 = vxor.u32 %v595, 2147483648
        %v656 = vxor.u32 %v598, 2147483648
        %v657 = vxor.u32 %v603, 2147483648
        %v658 = vxor.u32 %v606, 2147483648
        %v659 = vxor.u32 %v611, 2147483648
        %v660 = vxor.u32 %v614, 2147483648
        %v661 = vxor.u32 %v619, 2147483648
        %v662 = vxor.u32 %v622, 2147483648
        %v663 = vxor.u32 %v627, 2147483648
        %v664 = vxor.u32 %v630, 2147483648
        %v665 = vmul.f32 %v633, 1.442695
        %v666 = vpow.pop %v665
        %v667 = vmul.f32 %v634, 1.442695
        %v668 = vpow.pop %v667
        %v669 = vmul.f32 %v635, 1.442695
        %v670 = vpow.pop %v669
        %v671 = vmul.f32 %v636, 1.442695
        %v672 = vpow.pop %v671
        %v673 = vmul.f32 %v637, 1.442695
        %v674 = vpow.pop %v673
        %v675 = vmul.f32 %v638, 1.442695
        %v676 = vpow.pop %v675
        %v677 = vmul.f32 %v639, 1.442695
        %v678 = vpow.pop %v677
        %v679 = vmul.f32 %v640, 1.442695
        %v680 = vpow.pop %v679
        %v681 = vmul.f32 %v641, 1.442695
        %v682 = vpow.pop %v681
        %v683 = vmul.f32 %v642, 1.442695
        %v684 = vpow.pop %v683
        %v685 = vmul.f32 %v643, 1.442695
        %v686 = vpow.pop %v685
        %v687 = vmul.f32 %v644, 1.442695
        %v688 = vpow.pop %v687
        %v689 = vmul.f32 %v645, 1.442695
        %v690 = vpow.pop %v689
        %v691 = vmul.f32 %v646, 1.442695
        %v692 = vpow.pop %v691
        %v693 = vmul.f32 %v647, 1.442695
        %v694 = vpow.pop %v693
        %v695 = vmul.f32 %v648, 1.442695
        %v696 = vpow.pop %v695
        %v697 = vmul.f32 %v649, 1.442695
        %v698 = vpow.pop %v697
        %v699 = vmul.f32 %v650, 1.442695
        %v700 = vpow.pop %v699
        %v701 = vmul.f32 %v651, 1.442695
        %v702 = vpow.pop %v701
        %v703 = vmul.f32 %v652, 1.442695
        %v704 = vpow.pop %v703
        %v705 = vmul.f32 %v653, 1.442695
        %v706 = vpow.pop %v705
        %v707 = vmul.f32 %v654, 1.442695
        %v708 = vpow.pop %v707
        %v709 = vmul.f32 %v655, 1.442695
        %v710 = vpow.pop %v709
        %v711 = vmul.f32 %v656, 1.442695
        %v712 = vpow.pop %v711
        %v713 = vmul.f32 %v657, 1.442695
        %v714 = vpow.pop %v713
        %v715 = vmul.f32 %v658, 1.442695
        %v716 = vpow.pop %v715
        %v717 = vmul.f32 %v659, 1.442695
        %v718 = vpow.pop %v717
        %v719 = vmul.f32 %v660, 1.442695
        %v720 = vpow.pop %v719
        %v721 = vmul.f32 %v661, 1.442695
        %v722 = vpow.pop %v721
        %v723 = vmul.f32 %v662, 1.442695
        %v724 = vpow.pop %v723
        %v725 = vmul.f32 %v663, 1.442695
        %v726 = vpow.pop %v725
        %v727 = vmul.f32 %v664, 1.442695
        %v728 = vpow.pop %v727
        %v729 = vadd.f32 %v666, 1.0
        %v730 = vadd.f32 %v668, 1.0
        %v731 = vadd.f32 %v670, 1.0
        %v732 = vadd.f32 %v672, 1.0
        %v733 = vadd.f32 %v674, 1.0
        %v734 = vadd.f32 %v676, 1.0
        %v735 = vadd.f32 %v678, 1.0
        %v736 = vadd.f32 %v680, 1.0
        %v737 = vadd.f32 %v682, 1.0
        %v738 = vadd.f32 %v684, 1.0
        %v739 = vadd.f32 %v686, 1.0
        %v740 = vadd.f32 %v688, 1.0
        %v741 = vadd.f32 %v690, 1.0
        %v742 = vadd.f32 %v692, 1.0
        %v743 = vadd.f32 %v694, 1.0
        %v744 = vadd.f32 %v696, 1.0
        %v745 = vadd.f32 %v698, 1.0
        %v746 = vadd.f32 %v700, 1.0
        %v747 = vadd.f32 %v702, 1.0
        %v748 = vadd.f32 %v704, 1.0
        %v749 = vadd.f32 %v706, 1.0
        %v750 = vadd.f32 %v708, 1.0
        %v751 = vadd.f32 %v710, 1.0
        %v752 = vadd.f32 %v712, 1.0
        %v753 = vadd.f32 %v714, 1.0
        %v754 = vadd.f32 %v716, 1.0
        %v755 = vadd.f32 %v718, 1.0
        %v756 = vadd.f32 %v720, 1.0
        %v757 = vadd.f32 %v722, 1.0
        %v758 = vadd.f32 %v724, 1.0
        %v759 = vadd.f32 %v726, 1.0
        %v760 = vadd.f32 %v728, 1.0
        %v761 = vrcp.pop %v729
        %v762 = vmul.f32 1.0, %v761
        %v763 = vrcp.pop %v730
        %v764 = vmul.f32 1.0, %v763
        %v765 = vrcp.pop %v731
        %v766 = vmul.f32 1.0, %v765
        %v767 = vrcp.pop %v732
        %v768 = vmul.f32 1.0, %v767
        %v769 = vrcp.pop %v733
        %v770 = vmul.f32 1.0, %v769
        %v771 = vrcp.pop %v734
        %v772 = vmul.f32 1.0, %v771
        %v773 = vrcp.pop %v735
        %v774 = vmul.f32 1.0, %v773
        %v775 = vrcp.pop %v736
        %v776 = vmul.f32 1.0, %v775
        %v777 = vrcp.pop %v737
        %v778 = vmul.f32 1.0, %v777
        %v779 = vrcp.pop %v738
        %v780 = vmul.f32 1.0, %v779
        %v781 = vrcp.pop %v739
        %v782 = vmul.f32 1.0, %v781
        %v783 = vrcp.pop %v740
        %v784 = vmul.f32 1.0, %v783
        %v785 = vrcp.pop %v741
        %v786 = vmul.f32 1.0, %v785
        %v787 = vrcp.pop %v742
        %v788 = vmul.f32 1.0, %v787
        %v789 = vrcp.pop %v743
        %v790 = vmul.f32 1.0, %v789
        %v791 = vrcp.pop %v744
        %v792 = vmul.f32 1.0, %v791
        %v793 = vrcp.pop %v745
        %v794 = vmul.f32 1.0, %v793
        %v795 = vrcp.pop %v746
        %v796 = vmul.f32 1.0, %v795
        %v797 = vrcp.pop %v747
        %v798 = vmul.f32 1.0, %v797
        %v799 = vrcp.pop %v748
        %v800 = vmul.f32 1.0, %v799
        %v801 = vrcp.pop %v749
        %v802 = vmul.f32 1.0, %v801
        %v803 = vrcp.pop %v750
        %v804 = vmul.f32 1.0, %v803
        %v805 = vrcp.pop %v751
        %v806 = vmul.f32 1.0, %v805
        %v807 = vrcp.pop %v752
        %v808 = vmul.f32 1.0, %v807
        %v809 = vrcp.pop %v753
        %v810 = vmul.f32 1.0, %v809
        %v811 = vrcp.pop %v754
        %v812 = vmul.f32 1.0, %v811
        %v813 = vrcp.pop %v755
        %v814 = vmul.f32 1.0, %v813
        %v815 = vrcp.pop %v756
        %v816 = vmul.f32 1.0, %v815
        %v817 = vrcp.pop %v757
        %v818 = vmul.f32 1.0, %v817
        %v819 = vrcp.pop %v758
        %v820 = vmul.f32 1.0, %v819
        %v821 = vrcp.pop %v759
        %v822 = vmul.f32 1.0, %v821
        %v823 = vrcp.pop %v760
        %v824 = vmul.f32 1.0, %v823
        %v825 = vmul.f32 %v507, %v762
        %v826 = vmul.f32 %v510, %v764
        %v827 = vmul.f32 %v515, %v766
        %v828 = vmul.f32 %v518, %v768
        %v829 = vmul.f32 %v523, %v770
        %v830 = vmul.f32 %v526, %v772
        %v831 = vmul.f32 %v531, %v774
        %v832 = vmul.f32 %v534, %v776
        %v833 = vmul.f32 %v539, %v778
        %v834 = vmul.f32 %v542, %v780
        %v835 = vmul.f32 %v547, %v782
        %v836 = vmul.f32 %v550, %v784
        %v837 = vmul.f32 %v555, %v786
        %v838 = vmul.f32 %v558, %v788
        %v839 = vmul.f32 %v563, %v790
        %v840 = vmul.f32 %v566, %v792
        %v841 = vmul.f32 %v571, %v794
        %v842 = vmul.f32 %v574, %v796
        %v843 = vmul.f32 %v579, %v798
        %v844 = vmul.f32 %v582, %v800
        %v845 = vmul.f32 %v587, %v802
        %v846 = vmul.f32 %v590, %v804
        %v847 = vmul.f32 %v595, %v806
        %v848 = vmul.f32 %v598, %v808
        %v849 = vmul.f32 %v603, %v810
        %v850 = vmul.f32 %v606, %v812
        %v851 = vmul.f32 %v611, %v814
        %v852 = vmul.f32 %v614, %v816
        %v853 = vmul.f32 %v619, %v818
        %v854 = vmul.f32 %v622, %v820
        %v855 = vmul.f32 %v627, %v822
        %v856 = vmul.f32 %v630, %v824
        %v857 = vmul.f32 %v825, 1.6768
        %v858 = vmul.f32 %v826, 1.6768
        %v859 = vmul.f32 %v827, 1.6768
        %v860 = vmul.f32 %v828, 1.6768
        %v861 = vmul.f32 %v829, 1.6768
        %v862 = vmul.f32 %v830, 1.6768
        %v863 = vmul.f32 %v831, 1.6768
        %v864 = vmul.f32 %v832, 1.6768
        %v865 = vmul.f32 %v833, 1.6768
        %v866 = vmul.f32 %v834, 1.6768
        %v867 = vmul.f32 %v835, 1.6768
        %v868 = vmul.f32 %v836, 1.6768
        %v869 = vmul.f32 %v837, 1.6768
        %v870 = vmul.f32 %v838, 1.6768
        %v871 = vmul.f32 %v839, 1.6768
        %v872 = vmul.f32 %v840, 1.6768
        %v873 = vmul.f32 %v841, 1.6768
        %v874 = vmul.f32 %v842, 1.6768
        %v875 = vmul.f32 %v843, 1.6768
        %v876 = vmul.f32 %v844, 1.6768
        %v877 = vmul.f32 %v845, 1.6768
        %v878 = vmul.f32 %v846, 1.6768
        %v879 = vmul.f32 %v847, 1.6768
        %v880 = vmul.f32 %v848, 1.6768
        %v881 = vmul.f32 %v849, 1.6768
        %v882 = vmul.f32 %v850, 1.6768
        %v883 = vmul.f32 %v851, 1.6768
        %v884 = vmul.f32 %v852, 1.6768
        %v885 = vmul.f32 %v853, 1.6768
        %v886 = vmul.f32 %v854, 1.6768
        %v887 = vmul.f32 %v855, 1.6768
        %v888 = vmul.f32 %v856, 1.6768
        %889 = vst [vmem:[#allocation2] sm:$0xff] 0.0
        %890 = vst [vmem:[#allocation2 + $0x8] sm:$0xff] 0.0
        %891 = vst [vmem:[#allocation2 + $0x10] sm:$0x3] 0.0
        %892 = vst [vmem:[#allocation2 + $0x18] sm:$0xff] 0.0
        %893 = vst [vmem:[#allocation2 + $0x20] sm:$0xff] 0.0
        %894 = vst [vmem:[#allocation2 + $0x28] sm:$0x3] 0.0
        %895 = vst [vmem:[#allocation2 + $0x30] sm:$0xff] 0.0
        %896 = vst [vmem:[#allocation2 + $0x38] sm:$0xff] 0.0
        %897 = vst [vmem:[#allocation2 + $0x40] sm:$0x3] 0.0
        %898 = vst [vmem:[#allocation2 + $0x48] sm:$0xff] 0.0
        %899 = vst [vmem:[#allocation2 + $0x50] sm:$0xff] 0.0
        %900 = vst [vmem:[#allocation2 + $0x58] sm:$0x3] 0.0
        %901 = vst [vmem:[#allocation2 + $0x60] sm:$0xff] 0.0
        %902 = vst [vmem:[#allocation2 + $0x68] sm:$0xff] 0.0
        %903 = vst [vmem:[#allocation2 + $0x70] sm:$0x3] 0.0
        %904 = vst [vmem:[#allocation2 + $0x78] sm:$0xff] 0.0
        %905 = vst [vmem:[#allocation2 + $0x80] sm:$0xff] 0.0
        %906 = vst [vmem:[#allocation2 + $0x88] sm:$0x3] 0.0
        %907 = vst [vmem:[#allocation2 + $0x90] sm:$0xff] 0.0
        %908 = vst [vmem:[#allocation2 + $0x98] sm:$0xff] 0.0
        %909 = vst [vmem:[#allocation2 + $0xa0] sm:$0x3] 0.0
        %910 = vst [vmem:[#allocation2 + $0xa8] sm:$0xff] 0.0
        %911 = vst [vmem:[#allocation2 + $0xb0] sm:$0xff] 0.0
        %912 = vst [vmem:[#allocation2 + $0xb8] sm:$0x3] 0.0
        %913 = vst [vmem:[#allocation2 + $0xc0] sm:$0xff] 0.0
        %914 = vst [vmem:[#allocation2 + $0xc8] sm:$0xff] 0.0
        %915 = vst [vmem:[#allocation2 + $0xd0] sm:$0x3] 0.0
        %916 = vst [vmem:[#allocation2 + $0xd8] sm:$0xff] 0.0
        %917 = vst [vmem:[#allocation2 + $0xe0] sm:$0xff] 0.0
        %918 = vst [vmem:[#allocation2 + $0xe8] sm:$0x3] 0.0
        %919 = vst [vmem:[#allocation2 + $0xf0] sm:$0xff] 0.0
        %920 = vst [vmem:[#allocation2 + $0xf8] sm:$0xff] 0.0
        %921 = vst [vmem:[#allocation2 + $0x100] sm:$0x3] 0.0
        %922 = vst [vmem:[#allocation2 + $0x108] sm:$0xff] 0.0
        %923 = vst [vmem:[#allocation2 + $0x110] sm:$0xff] 0.0
        %924 = vst [vmem:[#allocation2 + $0x118] sm:$0x3] 0.0
        %925 = vst [vmem:[#allocation2 + $0x120] sm:$0xff] 0.0
        %926 = vst [vmem:[#allocation2 + $0x128] sm:$0xff] 0.0
        %927 = vst [vmem:[#allocation2 + $0x130] sm:$0x3] 0.0
        %928 = vst [vmem:[#allocation2 + $0x138] sm:$0xff] 0.0
        %929 = vst [vmem:[#allocation2 + $0x140] sm:$0xff] 0.0
        %930 = vst [vmem:[#allocation2 + $0x148] sm:$0x3] 0.0
        %931 = vst [vmem:[#allocation2 + $0x150] sm:$0xff] 0.0
        %932 = vst [vmem:[#allocation2 + $0x158] sm:$0xff] 0.0
        %933 = vst [vmem:[#allocation2 + $0x160] sm:$0x3] 0.0
        %934 = vst [vmem:[#allocation2 + $0x168] sm:$0xff] 0.0
        %935 = vst [vmem:[#allocation2 + $0x170] sm:$0xff] 0.0
        %936 = vst [vmem:[#allocation2 + $0x178] sm:$0x3] 0.0
        %937 = vst [vmem:[#allocation2 + $0x180] sm:$0xff] 0.0
        %938 = vst [vmem:[#allocation2 + $0x188] sm:$0xff] 0.0
        %939 = vst [vmem:[#allocation2 + $0x190] sm:$0x3] 0.0
        %940 = vst [vmem:[#allocation2 + $0x198] sm:$0xff] 0.0
        %941 = vst [vmem:[#allocation2 + $0x1a0] sm:$0xff] 0.0
        %942 = vst [vmem:[#allocation2 + $0x1a8] sm:$0x3] 0.0
        %s943 = scalar_lea.vmem [#allocation2], 24
        %944 = vst [vmem:[%s943 + $0x1] sm:$0xff] %v857
        %945 = vst [vmem:[%s943 + $0x9] sm:$0xff] %v858
        %s946 = scalar_lea.vmem [#allocation2], 48
        %947 = vst [vmem:[%s946 + $0x1] sm:$0xff] %v859
        %948 = vst [vmem:[%s946 + $0x9] sm:$0xff] %v860
        %s949 = scalar_lea.vmem [#allocation2], 72
        %950 = vst [vmem:[%s949 + $0x1] sm:$0xff] %v861
        %951 = vst [vmem:[%s949 + $0x9] sm:$0xff] %v862
        %s952 = scalar_lea.vmem [#allocation2], 96
        %953 = vst [vmem:[%s952 + $0x1] sm:$0xff] %v863
        %954 = vst [vmem:[%s952 + $0x9] sm:$0xff] %v864
        %s955 = scalar_lea.vmem [#allocation2], 120
        %956 = vst [vmem:[%s955 + $0x1] sm:$0xff] %v865
        %957 = vst [vmem:[%s955 + $0x9] sm:$0xff] %v866
        %s958 = scalar_lea.vmem [#allocation2], 144
        %959 = vst [vmem:[%s958 + $0x1] sm:$0xff] %v867
        %960 = vst [vmem:[%s958 + $0x9] sm:$0xff] %v868
        %s961 = scalar_lea.vmem [#allocation2], 168
        %962 = vst [vmem:[%s961 + $0x1] sm:$0xff] %v869
        %963 = vst [vmem:[%s961 + $0x9] sm:$0xff] %v870
        %s964 = scalar_lea.vmem [#allocation2], 192
        %965 = vst [vmem:[%s964 + $0x1] sm:$0xff] %v871
        %966 = vst [vmem:[%s964 + $0x9] sm:$0xff] %v872
        %s967 = scalar_lea.vmem [#allocation2], 216
        %968 = vst [vmem:[%s967 + $0x1] sm:$0xff] %v873
        %969 = vst [vmem:[%s967 + $0x9] sm:$0xff] %v874
        %s970 = scalar_lea.vmem [#allocation2], 240
        %971 = vst [vmem:[%s970 + $0x1] sm:$0xff] %v875
        %972 = vst [vmem:[%s970 + $0x9] sm:$0xff] %v876
        %s973 = scalar_lea.vmem [#allocation2], 264
        %974 = vst [vmem:[%s973 + $0x1] sm:$0xff] %v877
        %975 = vst [vmem:[%s973 + $0x9] sm:$0xff] %v878
        %s976 = scalar_lea.vmem [#allocation2], 288
        %977 = vst [vmem:[%s976 + $0x1] sm:$0xff] %v879
        %978 = vst [vmem:[%s976 + $0x9] sm:$0xff] %v880
        %s979 = scalar_lea.vmem [#allocation2], 312
        %980 = vst [vmem:[%s979 + $0x1] sm:$0xff] %v881
        %981 = vst [vmem:[%s979 + $0x9] sm:$0xff] %v882
        %s982 = scalar_lea.vmem [#allocation2], 336
        %983 = vst [vmem:[%s982 + $0x1] sm:$0xff] %v883
        %984 = vst [vmem:[%s982 + $0x9] sm:$0xff] %v884
        %s985 = scalar_lea.vmem [#allocation2], 360
        %986 = vst [vmem:[%s985 + $0x1] sm:$0xff] %v885
        %987 = vst [vmem:[%s985 + $0x9] sm:$0xff] %v886
        %s988 = scalar_lea.vmem [#allocation2], 384
        %989 = vst [vmem:[%s988 + $0x1] sm:$0xff] %v887
        %990 = vst [vmem:[%s988 + $0x9] sm:$0xff] %v888
        %v991 = vld [vmem:[#allocation2] sm:$0xff]
        %v992 = vld [vmem:[#allocation2 + $0x8] sm:$0xff]
        %v993 = vld [vmem:[#allocation2 + $0x10] sm:$0x3]
        %v994 = vld [vmem:[#allocation2 + $0x18] sm:$0xff]
        %v995 = vld [vmem:[#allocation2 + $0x20] sm:$0xff]
        %v996 = vld [vmem:[#allocation2 + $0x28] sm:$0x3]
        %v997 = vld [vmem:[#allocation2 + $0x30] sm:$0xff]
        %v998 = vld [vmem:[#allocation2 + $0x38] sm:$0xff]
        %v999 = vld [vmem:[#allocation2 + $0x40] sm:$0x3]
        %v1000 = vld [vmem:[#allocation2 + $0x48] sm:$0xff]
        %v1001 = vld [vmem:[#allocation2 + $0x50] sm:$0xff]
        %v1002 = vld [vmem:[#allocation2 + $0x58] sm:$0x3]
        %v1003 = vld [vmem:[#allocation2 + $0x60] sm:$0xff]
        %v1004 = vld [vmem:[#allocation2 + $0x68] sm:$0xff]
        %v1005 = vld [vmem:[#allocation2 + $0x70] sm:$0x3]
        %v1006 = vld [vmem:[#allocation2 + $0x78] sm:$0xff]
        %v1007 = vld [vmem:[#allocation2 + $0x80] sm:$0xff]
        %v1008 = vld [vmem:[#allocation2 + $0x88] sm:$0x3]
        %v1009 = vld [vmem:[#allocation2 + $0x90] sm:$0xff]
        %v1010 = vld [vmem:[#allocation2 + $0x98] sm:$0xff]
        %v1011 = vld [vmem:[#allocation2 + $0xa0] sm:$0x3]
        %v1012 = vld [vmem:[#allocation2 + $0xa8] sm:$0xff]
        %v1013 = vld [vmem:[#allocation2 + $0xb0] sm:$0xff]
        %v1014 = vld [vmem:[#allocation2 + $0xb8] sm:$0x3]
        %v1015 = vld [vmem:[#allocation2 + $0xc0] sm:$0xff]
        %v1016 = vld [vmem:[#allocation2 + $0xc8] sm:$0xff]
        %v1017 = vld [vmem:[#allocation2 + $0xd0] sm:$0x3]
        %v1018 = vld [vmem:[#allocation2 + $0xd8] sm:$0xff]
        %v1019 = vld [vmem:[#allocation2 + $0xe0] sm:$0xff]
        %v1020 = vld [vmem:[#allocation2 + $0xe8] sm:$0x3]
        %v1021 = vld [vmem:[#allocation2 + $0xf0] sm:$0xff]
        %v1022 = vld [vmem:[#allocation2 + $0xf8] sm:$0xff]
        %v1023 = vld [vmem:[#allocation2 + $0x100] sm:$0x3]
        %v1024 = vld [vmem:[#allocation2 + $0x108] sm:$0xff]
        %v1025 = vld [vmem:[#allocation2 + $0x110] sm:$0xff]
        %v1026 = vld [vmem:[#allocation2 + $0x118] sm:$0x3]
        %v1027 = vld [vmem:[#allocation2 + $0x120] sm:$0xff]
        %v1028 = vld [vmem:[#allocation2 + $0x128] sm:$0xff]
        %v1029 = vld [vmem:[#allocation2 + $0x130] sm:$0x3]
        %v1030 = vld [vmem:[#allocation2 + $0x138] sm:$0xff]
        %v1031 = vld [vmem:[#allocation2 + $0x140] sm:$0xff]
        %v1032 = vld [vmem:[#allocation2 + $0x148] sm:$0x3]
        %v1033 = vld [vmem:[#allocation2 + $0x150] sm:$0xff]
        %v1034 = vld [vmem:[#allocation2 + $0x158] sm:$0xff]
        %v1035 = vld [vmem:[#allocation2 + $0x160] sm:$0x3]
        %v1036 = vld [vmem:[#allocation2 + $0x168] sm:$0xff]
        %v1037 = vld [vmem:[#allocation2 + $0x170] sm:$0xff]
        %v1038 = vld [vmem:[#allocation2 + $0x178] sm:$0x3]
        %v1039 = vld [vmem:[#allocation2 + $0x180] sm:$0xff]
        %v1040 = vld [vmem:[#allocation2 + $0x188] sm:$0xff]
        %v1041 = vld [vmem:[#allocation2 + $0x190] sm:$0x3]
        %v1042 = vld [vmem:[#allocation2 + $0x198] sm:$0xff]
        %v1043 = vld [vmem:[#allocation2 + $0x1a0] sm:$0xff]
        %v1044 = vld [vmem:[#allocation2 + $0x1a8] sm:$0x3]
        %v1045 = vld [vmem:[#allocation8] sm:$0x1]
        %v1046 = vlaneseq
        %v1047 = vshrl.u32 %v1046, 7
        %v1048 = vsub.s32 0, %v1047
        %v1049 = vrot.slane %v1045, %v1048
        %v1050 = vmul.f32 %v991, %v1049
        %v1051 = vmul.f32 %v992, %v1049
        %v1052 = vmul.f32 %v994, %v1049
        %v1053 = vmul.f32 %v995, %v1049
        %v1054 = vmul.f32 %v997, %v1049
        %v1055 = vmul.f32 %v998, %v1049
        %v1056 = vmul.f32 %v1000, %v1049
        %v1057 = vmul.f32 %v1001, %v1049
        %v1058 = vmul.f32 %v1003, %v1049
        %v1059 = vmul.f32 %v1004, %v1049
        %v1060 = vmul.f32 %v1006, %v1049
        %v1061 = vmul.f32 %v1007, %v1049
        %v1062 = vmul.f32 %v1009, %v1049
        %v1063 = vmul.f32 %v1010, %v1049
        %v1064 = vmul.f32 %v1012, %v1049
        %v1065 = vmul.f32 %v1013, %v1049
        %v1066 = vmul.f32 %v1015, %v1049
        %v1067 = vmul.f32 %v1016, %v1049
        %v1068 = vmul.f32 %v1018, %v1049
        %v1069 = vmul.f32 %v1019, %v1049
        %v1070 = vmul.f32 %v1021, %v1049
        %v1071 = vmul.f32 %v1022, %v1049
        %v1072 = vmul.f32 %v1024, %v1049
        %v1073 = vmul.f32 %v1025, %v1049
        %v1074 = vmul.f32 %v1027, %v1049
        %v1075 = vmul.f32 %v1028, %v1049
        %v1076 = vmul.f32 %v1030, %v1049
        %v1077 = vmul.f32 %v1031, %v1049
        %v1078 = vmul.f32 %v1033, %v1049
        %v1079 = vmul.f32 %v1034, %v1049
        %v1080 = vmul.f32 %v1036, %v1049
        %v1081 = vmul.f32 %v1037, %v1049
        %v1082 = vadd.f32 %v1050, 0.0
        %v1083 = vadd.f32 %v1051, 0.0
        %v1084 = vadd.f32 %v1052, 0.0
        %v1085 = vadd.f32 %v1053, 0.0
        %v1086 = vadd.f32 %v1054, 0.0
        %v1087 = vadd.f32 %v1055, 0.0
        %v1088 = vadd.f32 %v1056, 0.0
        %v1089 = vadd.f32 %v1057, 0.0
        %v1090 = vadd.f32 %v1058, 0.0
        %v1091 = vadd.f32 %v1059, 0.0
        %v1092 = vadd.f32 %v1060, 0.0
        %v1093 = vadd.f32 %v1061, 0.0
        %v1094 = vadd.f32 %v1062, 0.0
        %v1095 = vadd.f32 %v1063, 0.0
        %v1096 = vadd.f32 %v1064, 0.0
        %v1097 = vadd.f32 %v1065, 0.0
        %v1098 = vadd.f32 %v1066, 0.0
        %v1099 = vadd.f32 %v1067, 0.0
        %v1100 = vadd.f32 %v1068, 0.0
        %v1101 = vadd.f32 %v1069, 0.0
        %v1102 = vadd.f32 %v1070, 0.0
        %v1103 = vadd.f32 %v1071, 0.0
        %v1104 = vadd.f32 %v1072, 0.0
        %v1105 = vadd.f32 %v1073, 0.0
        %v1106 = vadd.f32 %v1074, 0.0
        %v1107 = vadd.f32 %v1075, 0.0
        %v1108 = vadd.f32 %v1076, 0.0
        %v1109 = vadd.f32 %v1077, 0.0
        %v1110 = vadd.f32 %v1078, 0.0
        %v1111 = vadd.f32 %v1079, 0.0
        %v1112 = vadd.f32 %v1080, 0.0
        %v1113 = vadd.f32 %v1081, 0.0
        %v1114 = vld [vmem:[#allocation8 + $0x1] sm:$0x1]
        %v1115 = vlaneseq
        %v1116 = vshrl.u32 %v1115, 7
        %v1117 = vsub.s32 0, %v1116
        %v1118 = vrot.slane %v1114, %v1117
        %v1119 = vmul.f32 %v991, %v1118
        %v1120 = vmul.f32 %v992, %v1118
        %v1121 = vmul.f32 %v993, %v1118
        %v1122 = vmul.f32 %v994, %v1118
        %v1123 = vmul.f32 %v995, %v1118
        %v1124 = vmul.f32 %v996, %v1118
        %v1125 = vmul.f32 %v997, %v1118
        %v1126 = vmul.f32 %v998, %v1118
        %v1127 = vmul.f32 %v999, %v1118
        %v1128 = vmul.f32 %v1000, %v1118
        %v1129 = vmul.f32 %v1001, %v1118
        %v1130 = vmul.f32 %v1002, %v1118
        %v1131 = vmul.f32 %v1003, %v1118
        %v1132 = vmul.f32 %v1004, %v1118
        %v1133 = vmul.f32 %v1005, %v1118
        %v1134 = vmul.f32 %v1006, %v1118
        %v1135 = vmul.f32 %v1007, %v1118
        %v1136 = vmul.f32 %v1008, %v1118
        %v1137 = vmul.f32 %v1009, %v1118
        %v1138 = vmul.f32 %v1010, %v1118
        %v1139 = vmul.f32 %v1011, %v1118
        %v1140 = vmul.f32 %v1012, %v1118
        %v1141 = vmul.f32 %v1013, %v1118
        %v1142 = vmul.f32 %v1014, %v1118
        %v1143 = vmul.f32 %v1015, %v1118
        %v1144 = vmul.f32 %v1016, %v1118
        %v1145 = vmul.f32 %v1017, %v1118
        %v1146 = vmul.f32 %v1018, %v1118
        %v1147 = vmul.f32 %v1019, %v1118
        %v1148 = vmul.f32 %v1020, %v1118
        %v1149 = vmul.f32 %v1021, %v1118
        %v1150 = vmul.f32 %v1022, %v1118
        %v1151 = vmul.f32 %v1023, %v1118
        %v1152 = vmul.f32 %v1024, %v1118
        %v1153 = vmul.f32 %v1025, %v1118
        %v1154 = vmul.f32 %v1026, %v1118
        %v1155 = vmul.f32 %v1027, %v1118
        %v1156 = vmul.f32 %v1028, %v1118
        %v1157 = vmul.f32 %v1029, %v1118
        %v1158 = vmul.f32 %v1030, %v1118
        %v1159 = vmul.f32 %v1031, %v1118
        %v1160 = vmul.f32 %v1032, %v1118
        %v1161 = vmul.f32 %v1033, %v1118
        %v1162 = vmul.f32 %v1034, %v1118
        %v1163 = vmul.f32 %v1035, %v1118
        %v1164 = vmul.f32 %v1036, %v1118
        %v1165 = vmul.f32 %v1037, %v1118
        %v1166 = vmul.f32 %v1038, %v1118
        %vm1215 = vcmask 1046528
        %v1216 = vrot.slane %v1119, 1
        %v1217 = vrot.slane %v1120, 1
        %v1218 = vsel %vm1215, %v1216, %v1217
        %v1219 = vrot.slane %v1121, 1
        %v1220 = vsel %vm1215, %v1217, %v1219
        %v1221 = vrot.slane %v1122, 1
        %v1222 = vrot.slane %v1123, 1
        %v1223 = vsel %vm1215, %v1221, %v1222
        %v1224 = vrot.slane %v1124, 1
        %v1225 = vsel %vm1215, %v1222, %v1224
        %v1226 = vrot.slane %v1125, 1
        %v1227 = vrot.slane %v1126, 1
        %v1228 = vsel %vm1215, %v1226, %v1227
        %v1229 = vrot.slane %v1127, 1
        %v1230 = vsel %vm1215, %v1227, %v1229
        %v1231 = vrot.slane %v1128, 1
        %v1232 = vrot.slane %v1129, 1
        %v1233 = vsel %vm1215, %v1231, %v1232
        %v1234 = vrot.slane %v1130, 1
        %v1235 = vsel %vm1215, %v1232, %v1234
        %v1236 = vrot.slane %v1131, 1
        %v1237 = vrot.slane %v1132, 1
        %v1238 = vsel %vm1215, %v1236, %v1237
        %v1239 = vrot.slane %v1133, 1
        %v1240 = vsel %vm1215, %v1237, %v1239
        %v1241 = vrot.slane %v1134, 1
        %v1242 = vrot.slane %v1135, 1
        %v1243 = vsel %vm1215, %v1241, %v1242
        %v1244 = vrot.slane %v1136, 1
        %v1245 = vsel %vm1215, %v1242, %v1244
        %v1246 = vrot.slane %v1137, 1
        %v1247 = vrot.slane %v1138, 1
        %v1248 = vsel %vm1215, %v1246, %v1247
        %v1249 = vrot.slane %v1139, 1
        %v1250 = vsel %vm1215, %v1247, %v1249
        %v1251 = vrot.slane %v1140, 1
        %v1252 = vrot.slane %v1141, 1
        %v1253 = vsel %vm1215, %v1251, %v1252
        %v1254 = vrot.slane %v1142, 1
        %v1255 = vsel %vm1215, %v1252, %v1254
        %v1256 = vrot.slane %v1143, 1
        %v1257 = vrot.slane %v1144, 1
        %v1258 = vsel %vm1215, %v1256, %v1257
        %v1259 = vrot.slane %v1145, 1
        %v1260 = vsel %vm1215, %v1257, %v1259
        %v1261 = vrot.slane %v1146, 1
        %v1262 = vrot.slane %v1147, 1
        %v1263 = vsel %vm1215, %v1261, %v1262
        %v1264 = vrot.slane %v1148, 1
        %v1265 = vsel %vm1215, %v1262, %v1264
        %v1266 = vrot.slane %v1149, 1
        %v1267 = vrot.slane %v1150, 1
        %v1268 = vsel %vm1215, %v1266, %v1267
        %v1269 = vrot.slane %v1151, 1
        %v1270 = vsel %vm1215, %v1267, %v1269
        %v1271 = vrot.slane %v1152, 1
        %v1272 = vrot.slane %v1153, 1
        %v1273 = vsel %vm1215, %v1271, %v1272
        %v1274 = vrot.slane %v1154, 1
        %v1275 = vsel %vm1215, %v1272, %v1274
        %v1276 = vrot.slane %v1155, 1
        %v1277 = vrot.slane %v1156, 1
        %v1278 = vsel %vm1215, %v1276, %v1277
        %v1279 = vrot.slane %v1157, 1
        %v1280 = vsel %vm1215, %v1277, %v1279
        %v1281 = vrot.slane %v1158, 1
        %v1282 = vrot.slane %v1159, 1
        %v1283 = vsel %vm1215, %v1281, %v1282
        %v1284 = vrot.slane %v1160, 1
        %v1285 = vsel %vm1215, %v1282, %v1284
        %v1286 = vrot.slane %v1161, 1
        %v1287 = vrot.slane %v1162, 1
        %v1288 = vsel %vm1215, %v1286, %v1287
        %v1289 = vrot.slane %v1163, 1
        %v1290 = vsel %vm1215, %v1287, %v1289
        %v1291 = vrot.slane %v1164, 1
        %v1292 = vrot.slane %v1165, 1
        %v1293 = vsel %vm1215, %v1291, %v1292
        %v1294 = vrot.slane %v1166, 1
        %v1295 = vsel %vm1215, %v1292, %v1294
        %v1328 = vadd.f32 %v1082, %v1218
        %v1329 = vadd.f32 %v1083, %v1220
        %v1330 = vadd.f32 %v1084, %v1223
        %v1331 = vadd.f32 %v1085, %v1225
        %v1332 = vadd.f32 %v1086, %v1228
        %v1333 = vadd.f32 %v1087, %v1230
        %v1334 = vadd.f32 %v1088, %v1233
        %v1335 = vadd.f32 %v1089, %v1235
        %v1336 = vadd.f32 %v1090, %v1238
        %v1337 = vadd.f32 %v1091, %v1240
        %v1338 = vadd.f32 %v1092, %v1243
        %v1339 = vadd.f32 %v1093, %v1245
        %v1340 = vadd.f32 %v1094, %v1248
        %v1341 = vadd.f32 %v1095, %v1250
        %v1342 = vadd.f32 %v1096, %v1253
        %v1343 = vadd.f32 %v1097, %v1255
        %v1344 = vadd.f32 %v1098, %v1258
        %v1345 = vadd.f32 %v1099, %v1260
        %v1346 = vadd.f32 %v1100, %v1263
        %v1347 = vadd.f32 %v1101, %v1265
        %v1348 = vadd.f32 %v1102, %v1268
        %v1349 = vadd.f32 %v1103, %v1270
        %v1350 = vadd.f32 %v1104, %v1273
        %v1351 = vadd.f32 %v1105, %v1275
        %v1352 = vadd.f32 %v1106, %v1278
        %v1353 = vadd.f32 %v1107, %v1280
        %v1354 = vadd.f32 %v1108, %v1283
        %v1355 = vadd.f32 %v1109, %v1285
        %v1356 = vadd.f32 %v1110, %v1288
        %v1357 = vadd.f32 %v1111, %v1290
        %v1358 = vadd.f32 %v1112, %v1293
        %v1359 = vadd.f32 %v1113, %v1295
        %v1360 = vld [vmem:[#allocation8 + $0x2] sm:$0x1]
        %v1361 = vlaneseq
        %v1362 = vshrl.u32 %v1361, 7
        %v1363 = vsub.s32 0, %v1362
        %v1364 = vrot.slane %v1360, %v1363
        %v1365 = vmul.f32 %v991, %v1364
        %v1366 = vmul.f32 %v992, %v1364
        %v1367 = vmul.f32 %v993, %v1364
        %v1368 = vmul.f32 %v994, %v1364
        %v1369 = vmul.f32 %v995, %v1364
        %v1370 = vmul.f32 %v996, %v1364
        %v1371 = vmul.f32 %v997, %v1364
        %v1372 = vmul.f32 %v998, %v1364
        %v1373 = vmul.f32 %v999, %v1364
        %v1374 = vmul.f32 %v1000, %v1364
        %v1375 = vmul.f32 %v1001, %v1364
        %v1376 = vmul.f32 %v1002, %v1364
        %v1377 = vmul.f32 %v1003, %v1364
        %v1378 = vmul.f32 %v1004, %v1364
        %v1379 = vmul.f32 %v1005, %v1364
        %v1380 = vmul.f32 %v1006, %v1364
        %v1381 = vmul.f32 %v1007, %v1364
        %v1382 = vmul.f32 %v1008, %v1364
        %v1383 = vmul.f32 %v1009, %v1364
        %v1384 = vmul.f32 %v1010, %v1364
        %v1385 = vmul.f32 %v1011, %v1364
        %v1386 = vmul.f32 %v1012, %v1364
        %v1387 = vmul.f32 %v1013, %v1364
        %v1388 = vmul.f32 %v1014, %v1364
        %v1389 = vmul.f32 %v1015, %v1364
        %v1390 = vmul.f32 %v1016, %v1364
        %v1391 = vmul.f32 %v1017, %v1364
        %v1392 = vmul.f32 %v1018, %v1364
        %v1393 = vmul.f32 %v1019, %v1364
        %v1394 = vmul.f32 %v1020, %v1364
        %v1395 = vmul.f32 %v1021, %v1364
        %v1396 = vmul.f32 %v1022, %v1364
        %v1397 = vmul.f32 %v1023, %v1364
        %v1398 = vmul.f32 %v1024, %v1364
        %v1399 = vmul.f32 %v1025, %v1364
        %v1400 = vmul.f32 %v1026, %v1364
        %v1401 = vmul.f32 %v1027, %v1364
        %v1402 = vmul.f32 %v1028, %v1364
        %v1403 = vmul.f32 %v1029, %v1364
        %v1404 = vmul.f32 %v1030, %v1364
        %v1405 = vmul.f32 %v1031, %v1364
        %v1406 = vmul.f32 %v1032, %v1364
        %v1407 = vmul.f32 %v1033, %v1364
        %v1408 = vmul.f32 %v1034, %v1364
        %v1409 = vmul.f32 %v1035, %v1364
        %v1410 = vmul.f32 %v1036, %v1364
        %v1411 = vmul.f32 %v1037, %v1364
        %v1412 = vmul.f32 %v1038, %v1364
        %vm1461 = vcmask 1045504
        %v1462 = vrot.slane %v1365, 2
        %v1463 = vrot.slane %v1366, 2
        %v1464 = vsel %vm1461, %v1462, %v1463
        %v1465 = vrot.slane %v1367, 2
        %v1466 = vsel %vm1461, %v1463, %v1465
        %v1467 = vrot.slane %v1368, 2
        %v1468 = vrot.slane %v1369, 2
        %v1469 = vsel %vm1461, %v1467, %v1468
        %v1470 = vrot.slane %v1370, 2
        %v1471 = vsel %vm1461, %v1468, %v1470
        %v1472 = vrot.slane %v1371, 2
        %v1473 = vrot.slane %v1372, 2
        %v1474 = vsel %vm1461, %v1472, %v1473
        %v1475 = vrot.slane %v1373, 2
        %v1476 = vsel %vm1461, %v1473, %v1475
        %v1477 = vrot.slane %v1374, 2
        %v1478 = vrot.slane %v1375, 2
        %v1479 = vsel %vm1461, %v1477, %v1478
        %v1480 = vrot.slane %v1376, 2
        %v1481 = vsel %vm1461, %v1478, %v1480
        %v1482 = vrot.slane %v1377, 2
        %v1483 = vrot.slane %v1378, 2
        %v1484 = vsel %vm1461, %v1482, %v1483
        %v1485 = vrot.slane %v1379, 2
        %v1486 = vsel %vm1461, %v1483, %v1485
        %v1487 = vrot.slane %v1380, 2
        %v1488 = vrot.slane %v1381, 2
        %v1489 = vsel %vm1461, %v1487, %v1488
        %v1490 = vrot.slane %v1382, 2
        %v1491 = vsel %vm1461, %v1488, %v1490
        %v1492 = vrot.slane %v1383, 2
        %v1493 = vrot.slane %v1384, 2
        %v1494 = vsel %vm1461, %v1492, %v1493
        %v1495 = vrot.slane %v1385, 2
        %v1496 = vsel %vm1461, %v1493, %v1495
        %v1497 = vrot.slane %v1386, 2
        %v1498 = vrot.slane %v1387, 2
        %v1499 = vsel %vm1461, %v1497, %v1498
        %v1500 = vrot.slane %v1388, 2
        %v1501 = vsel %vm1461, %v1498, %v1500
        %v1502 = vrot.slane %v1389, 2
        %v1503 = vrot.slane %v1390, 2
        %v1504 = vsel %vm1461, %v1502, %v1503
        %v1505 = vrot.slane %v1391, 2
        %v1506 = vsel %vm1461, %v1503, %v1505
        %v1507 = vrot.slane %v1392, 2
        %v1508 = vrot.slane %v1393, 2
        %v1509 = vsel %vm1461, %v1507, %v1508
        %v1510 = vrot.slane %v1394, 2
        %v1511 = vsel %vm1461, %v1508, %v1510
        %v1512 = vrot.slane %v1395, 2
        %v1513 = vrot.slane %v1396, 2
        %v1514 = vsel %vm1461, %v1512, %v1513
        %v1515 = vrot.slane %v1397, 2
        %v1516 = vsel %vm1461, %v1513, %v1515
        %v1517 = vrot.slane %v1398, 2
        %v1518 = vrot.slane %v1399, 2
        %v1519 = vsel %vm1461, %v1517, %v1518
        %v1520 = vrot.slane %v1400, 2
        %v1521 = vsel %vm1461, %v1518, %v1520
        %v1522 = vrot.slane %v1401, 2
        %v1523 = vrot.slane %v1402, 2
        %v1524 = vsel %vm1461, %v1522, %v1523
        %v1525 = vrot.slane %v1403, 2
        %v1526 = vsel %vm1461, %v1523, %v1525
        %v1527 = vrot.slane %v1404, 2
        %v1528 = vrot.slane %v1405, 2
        %v1529 = vsel %vm1461, %v1527, %v1528
        %v1530 = vrot.slane %v1406, 2
        %v1531 = vsel %vm1461, %v1528, %v1530
        %v1532 = vrot.slane %v1407, 2
        %v1533 = vrot.slane %v1408, 2
        %v1534 = vsel %vm1461, %v1532, %v1533
        %v1535 = vrot.slane %v1409, 2
        %v1536 = vsel %vm1461, %v1533, %v1535
        %v1537 = vrot.slane %v1410, 2
        %v1538 = vrot.slane %v1411, 2
        %v1539 = vsel %vm1461, %v1537, %v1538
        %v1540 = vrot.slane %v1412, 2
        %v1541 = vsel %vm1461, %v1538, %v1540
        %v1574 = vadd.f32 %v1328, %v1464
        %v1575 = vadd.f32 %v1329, %v1466
        %v1576 = vadd.f32 %v1330, %v1469
        %v1577 = vadd.f32 %v1331, %v1471
        %v1578 = vadd.f32 %v1332, %v1474
        %v1579 = vadd.f32 %v1333, %v1476
        %v1580 = vadd.f32 %v1334, %v1479
        %v1581 = vadd.f32 %v1335, %v1481
        %v1582 = vadd.f32 %v1336, %v1484
        %v1583 = vadd.f32 %v1337, %v1486
        %v1584 = vadd.f32 %v1338, %v1489
        %v1585 = vadd.f32 %v1339, %v1491
        %v1586 = vadd.f32 %v1340, %v1494
        %v1587 = vadd.f32 %v1341, %v1496
        %v1588 = vadd.f32 %v1342, %v1499
        %v1589 = vadd.f32 %v1343, %v1501
        %v1590 = vadd.f32 %v1344, %v1504
        %v1591 = vadd.f32 %v1345, %v1506
        %v1592 = vadd.f32 %v1346, %v1509
        %v1593 = vadd.f32 %v1347, %v1511
        %v1594 = vadd.f32 %v1348, %v1514
        %v1595 = vadd.f32 %v1349, %v1516
        %v1596 = vadd.f32 %v1350, %v1519
        %v1597 = vadd.f32 %v1351, %v1521
        %v1598 = vadd.f32 %v1352, %v1524
        %v1599 = vadd.f32 %v1353, %v1526
        %v1600 = vadd.f32 %v1354, %v1529
        %v1601 = vadd.f32 %v1355, %v1531
        %v1602 = vadd.f32 %v1356, %v1534
        %v1603 = vadd.f32 %v1357, %v1536
        %v1604 = vadd.f32 %v1358, %v1539
        %v1605 = vadd.f32 %v1359, %v1541
        %v1606 = vld [vmem:[#allocation8 + $0x3] sm:$0x1]
        %v1607 = vlaneseq
        %v1608 = vshrl.u32 %v1607, 7
        %v1609 = vsub.s32 0, %v1608
        %v1610 = vrot.slane %v1606, %v1609
        %v1611 = vmul.f32 %v994, %v1610
        %v1612 = vmul.f32 %v995, %v1610
        %v1613 = vmul.f32 %v997, %v1610
        %v1614 = vmul.f32 %v998, %v1610
        %v1615 = vmul.f32 %v1000, %v1610
        %v1616 = vmul.f32 %v1001, %v1610
        %v1617 = vmul.f32 %v1003, %v1610
        %v1618 = vmul.f32 %v1004, %v1610
        %v1619 = vmul.f32 %v1006, %v1610
        %v1620 = vmul.f32 %v1007, %v1610
        %v1621 = vmul.f32 %v1009, %v1610
        %v1622 = vmul.f32 %v1010, %v1610
        %v1623 = vmul.f32 %v1012, %v1610
        %v1624 = vmul.f32 %v1013, %v1610
        %v1625 = vmul.f32 %v1015, %v1610
        %v1626 = vmul.f32 %v1016, %v1610
        %v1627 = vmul.f32 %v1018, %v1610
        %v1628 = vmul.f32 %v1019, %v1610
        %v1629 = vmul.f32 %v1021, %v1610
        %v1630 = vmul.f32 %v1022, %v1610
        %v1631 = vmul.f32 %v1024, %v1610
        %v1632 = vmul.f32 %v1025, %v1610
        %v1633 = vmul.f32 %v1027, %v1610
        %v1634 = vmul.f32 %v1028, %v1610
        %v1635 = vmul.f32 %v1030, %v1610
        %v1636 = vmul.f32 %v1031, %v1610
        %v1637 = vmul.f32 %v1033, %v1610
        %v1638 = vmul.f32 %v1034, %v1610
        %v1639 = vmul.f32 %v1036, %v1610
        %v1640 = vmul.f32 %v1037, %v1610
        %v1641 = vmul.f32 %v1039, %v1610
        %v1642 = vmul.f32 %v1040, %v1610
        %v1643 = vadd.f32 %v1574, %v1611
        %v1644 = vadd.f32 %v1575, %v1612
        %v1645 = vadd.f32 %v1576, %v1613
        %v1646 = vadd.f32 %v1577, %v1614
        %v1647 = vadd.f32 %v1578, %v1615
        %v1648 = vadd.f32 %v1579, %v1616
        %v1649 = vadd.f32 %v1580, %v1617
        %v1650 = vadd.f32 %v1581, %v1618
        %v1651 = vadd.f32 %v1582, %v1619
        %v1652 = vadd.f32 %v1583, %v1620
        %v1653 = vadd.f32 %v1584, %v1621
        %v1654 = vadd.f32 %v1585, %v1622
        %v1655 = vadd.f32 %v1586, %v1623
        %v1656 = vadd.f32 %v1587, %v1624
        %v1657 = vadd.f32 %v1588, %v1625
        %v1658 = vadd.f32 %v1589, %v1626
        %v1659 = vadd.f32 %v1590, %v1627
        %v1660 = vadd.f32 %v1591, %v1628
        %v1661 = vadd.f32 %v1592, %v1629
        %v1662 = vadd.f32 %v1593, %v1630
        %v1663 = vadd.f32 %v1594, %v1631
        %v1664 = vadd.f32 %v1595, %v1632
        %v1665 = vadd.f32 %v1596, %v1633
        %v1666 = vadd.f32 %v1597, %v1634
        %v1667 = vadd.f32 %v1598, %v1635
        %v1668 = vadd.f32 %v1599, %v1636
        %v1669 = vadd.f32 %v1600, %v1637
        %v1670 = vadd.f32 %v1601, %v1638
        %v1671 = vadd.f32 %v1602, %v1639
        %v1672 = vadd.f32 %v1603, %v1640
        %v1673 = vadd.f32 %v1604, %v1641
        %v1674 = vadd.f32 %v1605, %v1642
        %v1675 = vld [vmem:[#allocation8 + $0x4] sm:$0x1]
        %v1676 = vlaneseq
        %v1677 = vshrl.u32 %v1676, 7
        %v1678 = vsub.s32 0, %v1677
        %v1679 = vrot.slane %v1675, %v1678
        %v1680 = vmul.f32 %v994, %v1679
        %v1681 = vmul.f32 %v995, %v1679
        %v1682 = vmul.f32 %v996, %v1679
        %v1683 = vmul.f32 %v997, %v1679
        %v1684 = vmul.f32 %v998, %v1679
        %v1685 = vmul.f32 %v999, %v1679
        %v1686 = vmul.f32 %v1000, %v1679
        %v1687 = vmul.f32 %v1001, %v1679
        %v1688 = vmul.f32 %v1002, %v1679
        %v1689 = vmul.f32 %v1003, %v1679
        %v1690 = vmul.f32 %v1004, %v1679
        %v1691 = vmul.f32 %v1005, %v1679
        %v1692 = vmul.f32 %v1006, %v1679
        %v1693 = vmul.f32 %v1007, %v1679
        %v1694 = vmul.f32 %v1008, %v1679
        %v1695 = vmul.f32 %v1009, %v1679
        %v1696 = vmul.f32 %v1010, %v1679
        %v1697 = vmul.f32 %v1011, %v1679
        %v1698 = vmul.f32 %v1012, %v1679
        %v1699 = vmul.f32 %v1013, %v1679
        %v1700 = vmul.f32 %v1014, %v1679
        %v1701 = vmul.f32 %v1015, %v1679
        %v1702 = vmul.f32 %v1016, %v1679
        %v1703 = vmul.f32 %v1017, %v1679
        %v1704 = vmul.f32 %v1018, %v1679
        %v1705 = vmul.f32 %v1019, %v1679
        %v1706 = vmul.f32 %v1020, %v1679
        %v1707 = vmul.f32 %v1021, %v1679
        %v1708 = vmul.f32 %v1022, %v1679
        %v1709 = vmul.f32 %v1023, %v1679
        %v1710 = vmul.f32 %v1024, %v1679
        %v1711 = vmul.f32 %v1025, %v1679
        %v1712 = vmul.f32 %v1026, %v1679
        %v1713 = vmul.f32 %v1027, %v1679
        %v1714 = vmul.f32 %v1028, %v1679
        %v1715 = vmul.f32 %v1029, %v1679
        %v1716 = vmul.f32 %v1030, %v1679
        %v1717 = vmul.f32 %v1031, %v1679
        %v1718 = vmul.f32 %v1032, %v1679
        %v1719 = vmul.f32 %v1033, %v1679
        %v1720 = vmul.f32 %v1034, %v1679
        %v1721 = vmul.f32 %v1035, %v1679
        %v1722 = vmul.f32 %v1036, %v1679
        %v1723 = vmul.f32 %v1037, %v1679
        %v1724 = vmul.f32 %v1038, %v1679
        %v1725 = vmul.f32 %v1039, %v1679
        %v1726 = vmul.f32 %v1040, %v1679
        %v1727 = vmul.f32 %v1041, %v1679
        %v1776 = vrot.slane %v1680, 1
        %v1777 = vrot.slane %v1681, 1
        %v1778 = vsel %vm1215, %v1776, %v1777
        %v1779 = vrot.slane %v1682, 1
        %v1780 = vsel %vm1215, %v1777, %v1779
        %v1781 = vrot.slane %v1683, 1
        %v1782 = vrot.slane %v1684, 1
        %v1783 = vsel %vm1215, %v1781, %v1782
        %v1784 = vrot.slane %v1685, 1
        %v1785 = vsel %vm1215, %v1782, %v1784
        %v1786 = vrot.slane %v1686, 1
        %v1787 = vrot.slane %v1687, 1
        %v1788 = vsel %vm1215, %v1786, %v1787
        %v1789 = vrot.slane %v1688, 1
        %v1790 = vsel %vm1215, %v1787, %v1789
        %v1791 = vrot.slane %v1689, 1
        %v1792 = vrot.slane %v1690, 1
        %v1793 = vsel %vm1215, %v1791, %v1792
        %v1794 = vrot.slane %v1691, 1
        %v1795 = vsel %vm1215, %v1792, %v1794
        %v1796 = vrot.slane %v1692, 1
        %v1797 = vrot.slane %v1693, 1
        %v1798 = vsel %vm1215, %v1796, %v1797
        %v1799 = vrot.slane %v1694, 1
        %v1800 = vsel %vm1215, %v1797, %v1799
        %v1801 = vrot.slane %v1695, 1
        %v1802 = vrot.slane %v1696, 1
        %v1803 = vsel %vm1215, %v1801, %v1802
        %v1804 = vrot.slane %v1697, 1
        %v1805 = vsel %vm1215, %v1802, %v1804
        %v1806 = vrot.slane %v1698, 1
        %v1807 = vrot.slane %v1699, 1
        %v1808 = vsel %vm1215, %v1806, %v1807
        %v1809 = vrot.slane %v1700, 1
        %v1810 = vsel %vm1215, %v1807, %v1809
        %v1811 = vrot.slane %v1701, 1
        %v1812 = vrot.slane %v1702, 1
        %v1813 = vsel %vm1215, %v1811, %v1812
        %v1814 = vrot.slane %v1703, 1
        %v1815 = vsel %vm1215, %v1812, %v1814
        %v1816 = vrot.slane %v1704, 1
        %v1817 = vrot.slane %v1705, 1
        %v1818 = vsel %vm1215, %v1816, %v1817
        %v1819 = vrot.slane %v1706, 1
        %v1820 = vsel %vm1215, %v1817, %v1819
        %v1821 = vrot.slane %v1707, 1
        %v1822 = vrot.slane %v1708, 1
        %v1823 = vsel %vm1215, %v1821, %v1822
        %v1824 = vrot.slane %v1709, 1
        %v1825 = vsel %vm1215, %v1822, %v1824
        %v1826 = vrot.slane %v1710, 1
        %v1827 = vrot.slane %v1711, 1
        %v1828 = vsel %vm1215, %v1826, %v1827
        %v1829 = vrot.slane %v1712, 1
        %v1830 = vsel %vm1215, %v1827, %v1829
        %v1831 = vrot.slane %v1713, 1
        %v1832 = vrot.slane %v1714, 1
        %v1833 = vsel %vm1215, %v1831, %v1832
        %v1834 = vrot.slane %v1715, 1
        %v1835 = vsel %vm1215, %v1832, %v1834
        %v1836 = vrot.slane %v1716, 1
        %v1837 = vrot.slane %v1717, 1
        %v1838 = vsel %vm1215, %v1836, %v1837
        %v1839 = vrot.slane %v1718, 1
        %v1840 = vsel %vm1215, %v1837, %v1839
        %v1841 = vrot.slane %v1719, 1
        %v1842 = vrot.slane %v1720, 1
        %v1843 = vsel %vm1215, %v1841, %v1842
        %v1844 = vrot.slane %v1721, 1
        %v1845 = vsel %vm1215, %v1842, %v1844
        %v1846 = vrot.slane %v1722, 1
        %v1847 = vrot.slane %v1723, 1
        %v1848 = vsel %vm1215, %v1846, %v1847
        %v1849 = vrot.slane %v1724, 1
        %v1850 = vsel %vm1215, %v1847, %v1849
        %v1851 = vrot.slane %v1725, 1
        %v1852 = vrot.slane %v1726, 1
        %v1853 = vsel %vm1215, %v1851, %v1852
        %v1854 = vrot.slane %v1727, 1
        %v1855 = vsel %vm1215, %v1852, %v1854
        %v1888 = vadd.f32 %v1643, %v1778
        %v1889 = vadd.f32 %v1644, %v1780
        %v1890 = vadd.f32 %v1645, %v1783
        %v1891 = vadd.f32 %v1646, %v1785
        %v1892 = vadd.f32 %v1647, %v1788
        %v1893 = vadd.f32 %v1648, %v1790
        %v1894 = vadd.f32 %v1649, %v1793
        %v1895 = vadd.f32 %v1650, %v1795
        %v1896 = vadd.f32 %v1651, %v1798
        %v1897 = vadd.f32 %v1652, %v1800
        %v1898 = vadd.f32 %v1653, %v1803
        %v1899 = vadd.f32 %v1654, %v1805
        %v1900 = vadd.f32 %v1655, %v1808
        %v1901 = vadd.f32 %v1656, %v1810
        %v1902 = vadd.f32 %v1657, %v1813
        %v1903 = vadd.f32 %v1658, %v1815
        %v1904 = vadd.f32 %v1659, %v1818
        %v1905 = vadd.f32 %v1660, %v1820
        %v1906 = vadd.f32 %v1661, %v1823
        %v1907 = vadd.f32 %v1662, %v1825
        %v1908 = vadd.f32 %v1663, %v1828
        %v1909 = vadd.f32 %v1664, %v1830
        %v1910 = vadd.f32 %v1665, %v1833
        %v1911 = vadd.f32 %v1666, %v1835
        %v1912 = vadd.f32 %v1667, %v1838
        %v1913 = vadd.f32 %v1668, %v1840
        %v1914 = vadd.f32 %v1669, %v1843
        %v1915 = vadd.f32 %v1670, %v1845
        %v1916 = vadd.f32 %v1671, %v1848
        %v1917 = vadd.f32 %v1672, %v1850
        %v1918 = vadd.f32 %v1673, %v1853
        %v1919 = vadd.f32 %v1674, %v1855
        %v1920 = vld [vmem:[#allocation8 + $0x5] sm:$0x1]
        %v1921 = vlaneseq
        %v1922 = vshrl.u32 %v1921, 7
        %v1923 = vsub.s32 0, %v1922
        %v1924 = vrot.slane %v1920, %v1923
        %v1925 = vmul.f32 %v994, %v1924
        %v1926 = vmul.f32 %v995, %v1924
        %v1927 = vmul.f32 %v996, %v1924
        %v1928 = vmul.f32 %v997, %v1924
        %v1929 = vmul.f32 %v998, %v1924
        %v1930 = vmul.f32 %v999, %v1924
        %v1931 = vmul.f32 %v1000, %v1924
        %v1932 = vmul.f32 %v1001, %v1924
        %v1933 = vmul.f32 %v1002, %v1924
        %v1934 = vmul.f32 %v1003, %v1924
        %v1935 = vmul.f32 %v1004, %v1924
        %v1936 = vmul.f32 %v1005, %v1924
        %v1937 = vmul.f32 %v1006, %v1924
        %v1938 = vmul.f32 %v1007, %v1924
        %v1939 = vmul.f32 %v1008, %v1924
        %v1940 = vmul.f32 %v1009, %v1924
        %v1941 = vmul.f32 %v1010, %v1924
        %v1942 = vmul.f32 %v1011, %v1924
        %v1943 = vmul.f32 %v1012, %v1924
        %v1944 = vmul.f32 %v1013, %v1924
        %v1945 = vmul.f32 %v1014, %v1924
        %v1946 = vmul.f32 %v1015, %v1924
        %v1947 = vmul.f32 %v1016, %v1924
        %v1948 = vmul.f32 %v1017, %v1924
        %v1949 = vmul.f32 %v1018, %v1924
        %v1950 = vmul.f32 %v1019, %v1924
        %v1951 = vmul.f32 %v1020, %v1924
        %v1952 = vmul.f32 %v1021, %v1924
        %v1953 = vmul.f32 %v1022, %v1924
        %v1954 = vmul.f32 %v1023, %v1924
        %v1955 = vmul.f32 %v1024, %v1924
        %v1956 = vmul.f32 %v1025, %v1924
        %v1957 = vmul.f32 %v1026, %v1924
        %v1958 = vmul.f32 %v1027, %v1924
        %v1959 = vmul.f32 %v1028, %v1924
        %v1960 = vmul.f32 %v1029, %v1924
        %v1961 = vmul.f32 %v1030, %v1924
        %v1962 = vmul.f32 %v1031, %v1924
        %v1963 = vmul.f32 %v1032, %v1924
        %v1964 = vmul.f32 %v1033, %v1924
        %v1965 = vmul.f32 %v1034, %v1924
        %v1966 = vmul.f32 %v1035, %v1924
        %v1967 = vmul.f32 %v1036, %v1924
        %v1968 = vmul.f32 %v1037, %v1924
        %v1969 = vmul.f32 %v1038, %v1924
        %v1970 = vmul.f32 %v1039, %v1924
        %v1971 = vmul.f32 %v1040, %v1924
        %v1972 = vmul.f32 %v1041, %v1924
        %v2021 = vrot.slane %v1925, 2
        %v2022 = vrot.slane %v1926, 2
        %v2023 = vsel %vm1461, %v2021, %v2022
        %v2024 = vrot.slane %v1927, 2
        %v2025 = vsel %vm1461, %v2022, %v2024
        %v2026 = vrot.slane %v1928, 2
        %v2027 = vrot.slane %v1929, 2
        %v2028 = vsel %vm1461, %v2026, %v2027
        %v2029 = vrot.slane %v1930, 2
        %v2030 = vsel %vm1461, %v2027, %v2029
        %v2031 = vrot.slane %v1931, 2
        %v2032 = vrot.slane %v1932, 2
        %v2033 = vsel %vm1461, %v2031, %v2032
        %v2034 = vrot.slane %v1933, 2
        %v2035 = vsel %vm1461, %v2032, %v2034
        %v2036 = vrot.slane %v1934, 2
        %v2037 = vrot.slane %v1935, 2
        %v2038 = vsel %vm1461, %v2036, %v2037
        %v2039 = vrot.slane %v1936, 2
        %v2040 = vsel %vm1461, %v2037, %v2039
        %v2041 = vrot.slane %v1937, 2
        %v2042 = vrot.slane %v1938, 2
        %v2043 = vsel %vm1461, %v2041, %v2042
        %v2044 = vrot.slane %v1939, 2
        %v2045 = vsel %vm1461, %v2042, %v2044
        %v2046 = vrot.slane %v1940, 2
        %v2047 = vrot.slane %v1941, 2
        %v2048 = vsel %vm1461, %v2046, %v2047
        %v2049 = vrot.slane %v1942, 2
        %v2050 = vsel %vm1461, %v2047, %v2049
        %v2051 = vrot.slane %v1943, 2
        %v2052 = vrot.slane %v1944, 2
        %v2053 = vsel %vm1461, %v2051, %v2052
        %v2054 = vrot.slane %v1945, 2
        %v2055 = vsel %vm1461, %v2052, %v2054
        %v2056 = vrot.slane %v1946, 2
        %v2057 = vrot.slane %v1947, 2
        %v2058 = vsel %vm1461, %v2056, %v2057
        %v2059 = vrot.slane %v1948, 2
        %v2060 = vsel %vm1461, %v2057, %v2059
        %v2061 = vrot.slane %v1949, 2
        %v2062 = vrot.slane %v1950, 2
        %v2063 = vsel %vm1461, %v2061, %v2062
        %v2064 = vrot.slane %v1951, 2
        %v2065 = vsel %vm1461, %v2062, %v2064
        %v2066 = vrot.slane %v1952, 2
        %v2067 = vrot.slane %v1953, 2
        %v2068 = vsel %vm1461, %v2066, %v2067
        %v2069 = vrot.slane %v1954, 2
        %v2070 = vsel %vm1461, %v2067, %v2069
        %v2071 = vrot.slane %v1955, 2
        %v2072 = vrot.slane %v1956, 2
        %v2073 = vsel %vm1461, %v2071, %v2072
        %v2074 = vrot.slane %v1957, 2
        %v2075 = vsel %vm1461, %v2072, %v2074
        %v2076 = vrot.slane %v1958, 2
        %v2077 = vrot.slane %v1959, 2
        %v2078 = vsel %vm1461, %v2076, %v2077
        %v2079 = vrot.slane %v1960, 2
        %v2080 = vsel %vm1461, %v2077, %v2079
        %v2081 = vrot.slane %v1961, 2
        %v2082 = vrot.slane %v1962, 2
        %v2083 = vsel %vm1461, %v2081, %v2082
        %v2084 = vrot.slane %v1963, 2
        %v2085 = vsel %vm1461, %v2082, %v2084
        %v2086 = vrot.slane %v1964, 2
        %v2087 = vrot.slane %v1965, 2
        %v2088 = vsel %vm1461, %v2086, %v2087
        %v2089 = vrot.slane %v1966, 2
        %v2090 = vsel %vm1461, %v2087, %v2089
        %v2091 = vrot.slane %v1967, 2
        %v2092 = vrot.slane %v1968, 2
        %v2093 = vsel %vm1461, %v2091, %v2092
        %v2094 = vrot.slane %v1969, 2
        %v2095 = vsel %vm1461, %v2092, %v2094
        %v2096 = vrot.slane %v1970, 2
        %v2097 = vrot.slane %v1971, 2
        %v2098 = vsel %vm1461, %v2096, %v2097
        %v2099 = vrot.slane %v1972, 2
        %v2100 = vsel %vm1461, %v2097, %v2099
        %v2133 = vadd.f32 %v1888, %v2023
        %v2134 = vadd.f32 %v1889, %v2025
        %v2135 = vadd.f32 %v1890, %v2028
        %v2136 = vadd.f32 %v1891, %v2030
        %v2137 = vadd.f32 %v1892, %v2033
        %v2138 = vadd.f32 %v1893, %v2035
        %v2139 = vadd.f32 %v1894, %v2038
        %v2140 = vadd.f32 %v1895, %v2040
        %v2141 = vadd.f32 %v1896, %v2043
        %v2142 = vadd.f32 %v1897, %v2045
        %v2143 = vadd.f32 %v1898, %v2048
        %v2144 = vadd.f32 %v1899, %v2050
        %v2145 = vadd.f32 %v1900, %v2053
        %v2146 = vadd.f32 %v1901, %v2055
        %v2147 = vadd.f32 %v1902, %v2058
        %v2148 = vadd.f32 %v1903, %v2060
        %v2149 = vadd.f32 %v1904, %v2063
        %v2150 = vadd.f32 %v1905, %v2065
        %v2151 = vadd.f32 %v1906, %v2068
        %v2152 = vadd.f32 %v1907, %v2070
        %v2153 = vadd.f32 %v1908, %v2073
        %v2154 = vadd.f32 %v1909, %v2075
        %v2155 = vadd.f32 %v1910, %v2078
        %v2156 = vadd.f32 %v1911, %v2080
        %v2157 = vadd.f32 %v1912, %v2083
        %v2158 = vadd.f32 %v1913, %v2085
        %v2159 = vadd.f32 %v1914, %v2088
        %v2160 = vadd.f32 %v1915, %v2090
        %v2161 = vadd.f32 %v1916, %v2093
        %v2162 = vadd.f32 %v1917, %v2095
        %v2163 = vadd.f32 %v1918, %v2098
        %v2164 = vadd.f32 %v1919, %v2100
        %v2165 = vld [vmem:[#allocation8 + $0x6] sm:$0x1]
        %v2166 = vlaneseq
        %v2167 = vshrl.u32 %v2166, 7
        %v2168 = vsub.s32 0, %v2167
        %v2169 = vrot.slane %v2165, %v2168
        %v2170 = vmul.f32 %v997, %v2169
        %v2171 = vmul.f32 %v998, %v2169
        %v2172 = vmul.f32 %v1000, %v2169
        %v2173 = vmul.f32 %v1001, %v2169
        %v2174 = vmul.f32 %v1003, %v2169
        %v2175 = vmul.f32 %v1004, %v2169
        %v2176 = vmul.f32 %v1006, %v2169
        %v2177 = vmul.f32 %v1007, %v2169
        %v2178 = vmul.f32 %v1009, %v2169
        %v2179 = vmul.f32 %v1010, %v2169
        %v2180 = vmul.f32 %v1012, %v2169
        %v2181 = vmul.f32 %v1013, %v2169
        %v2182 = vmul.f32 %v1015, %v2169
        %v2183 = vmul.f32 %v1016, %v2169
        %v2184 = vmul.f32 %v1018, %v2169
        %v2185 = vmul.f32 %v1019, %v2169
        %v2186 = vmul.f32 %v1021, %v2169
        %v2187 = vmul.f32 %v1022, %v2169
        %v2188 = vmul.f32 %v1024, %v2169
        %v2189 = vmul.f32 %v1025, %v2169
        %v2190 = vmul.f32 %v1027, %v2169
        %v2191 = vmul.f32 %v1028, %v2169
        %v2192 = vmul.f32 %v1030, %v2169
        %v2193 = vmul.f32 %v1031, %v2169
        %v2194 = vmul.f32 %v1033, %v2169
        %v2195 = vmul.f32 %v1034, %v2169
        %v2196 = vmul.f32 %v1036, %v2169
        %v2197 = vmul.f32 %v1037, %v2169
        %v2198 = vmul.f32 %v1039, %v2169
        %v2199 = vmul.f32 %v1040, %v2169
        %v2200 = vmul.f32 %v1042, %v2169
        %v2201 = vmul.f32 %v1043, %v2169
        %v2202 = vadd.f32 %v2133, %v2170
        %v2203 = vadd.f32 %v2134, %v2171
        %v2204 = vadd.f32 %v2135, %v2172
        %v2205 = vadd.f32 %v2136, %v2173
        %v2206 = vadd.f32 %v2137, %v2174
        %v2207 = vadd.f32 %v2138, %v2175
        %v2208 = vadd.f32 %v2139, %v2176
        %v2209 = vadd.f32 %v2140, %v2177
        %v2210 = vadd.f32 %v2141, %v2178
        %v2211 = vadd.f32 %v2142, %v2179
        %v2212 = vadd.f32 %v2143, %v2180
        %v2213 = vadd.f32 %v2144, %v2181
        %v2214 = vadd.f32 %v2145, %v2182
        %v2215 = vadd.f32 %v2146, %v2183
        %v2216 = vadd.f32 %v2147, %v2184
        %v2217 = vadd.f32 %v2148, %v2185
        %v2218 = vadd.f32 %v2149, %v2186
        %v2219 = vadd.f32 %v2150, %v2187
        %v2220 = vadd.f32 %v2151, %v2188
        %v2221 = vadd.f32 %v2152, %v2189
        %v2222 = vadd.f32 %v2153, %v2190
        %v2223 = vadd.f32 %v2154, %v2191
        %v2224 = vadd.f32 %v2155, %v2192
        %v2225 = vadd.f32 %v2156, %v2193
        %v2226 = vadd.f32 %v2157, %v2194
        %v2227 = vadd.f32 %v2158, %v2195
        %v2228 = vadd.f32 %v2159, %v2196
        %v2229 = vadd.f32 %v2160, %v2197
        %v2230 = vadd.f32 %v2161, %v2198
        %v2231 = vadd.f32 %v2162, %v2199
        %v2232 = vadd.f32 %v2163, %v2200
        %v2233 = vadd.f32 %v2164, %v2201
        %v2234 = vld [vmem:[#allocation8 + $0x7] sm:$0x1]
        %v2235 = vlaneseq
        %v2236 = vshrl.u32 %v2235, 7
        %v2237 = vsub.s32 0, %v2236
        %v2238 = vrot.slane %v2234, %v2237
        %v2239 = vmul.f32 %v997, %v2238
        %v2240 = vmul.f32 %v998, %v2238
        %v2241 = vmul.f32 %v999, %v2238
        %v2242 = vmul.f32 %v1000, %v2238
        %v2243 = vmul.f32 %v1001, %v2238
        %v2244 = vmul.f32 %v1002, %v2238
        %v2245 = vmul.f32 %v1003, %v2238
        %v2246 = vmul.f32 %v1004, %v2238
        %v2247 = vmul.f32 %v1005, %v2238
        %v2248 = vmul.f32 %v1006, %v2238
        %v2249 = vmul.f32 %v1007, %v2238
        %v2250 = vmul.f32 %v1008, %v2238
        %v2251 = vmul.f32 %v1009, %v2238
        %v2252 = vmul.f32 %v1010, %v2238
        %v2253 = vmul.f32 %v1011, %v2238
        %v2254 = vmul.f32 %v1012, %v2238
        %v2255 = vmul.f32 %v1013, %v2238
        %v2256 = vmul.f32 %v1014, %v2238
        %v2257 = vmul.f32 %v1015, %v2238
        %v2258 = vmul.f32 %v1016, %v2238
        %v2259 = vmul.f32 %v1017, %v2238
        %v2260 = vmul.f32 %v1018, %v2238
        %v2261 = vmul.f32 %v1019, %v2238
        %v2262 = vmul.f32 %v1020, %v2238
        %v2263 = vmul.f32 %v1021, %v2238
        %v2264 = vmul.f32 %v1022, %v2238
        %v2265 = vmul.f32 %v1023, %v2238
        %v2266 = vmul.f32 %v1024, %v2238
        %v2267 = vmul.f32 %v1025, %v2238
        %v2268 = vmul.f32 %v1026, %v2238
        %v2269 = vmul.f32 %v1027, %v2238
        %v2270 = vmul.f32 %v1028, %v2238
        %v2271 = vmul.f32 %v1029, %v2238
        %v2272 = vmul.f32 %v1030, %v2238
        %v2273 = vmul.f32 %v1031, %v2238
        %v2274 = vmul.f32 %v1032, %v2238
        %v2275 = vmul.f32 %v1033, %v2238
        %v2276 = vmul.f32 %v1034, %v2238
        %v2277 = vmul.f32 %v1035, %v2238
        %v2278 = vmul.f32 %v1036, %v2238
        %v2279 = vmul.f32 %v1037, %v2238
        %v2280 = vmul.f32 %v1038, %v2238
        %v2281 = vmul.f32 %v1039, %v2238
        %v2282 = vmul.f32 %v1040, %v2238
        %v2283 = vmul.f32 %v1041, %v2238
        %v2284 = vmul.f32 %v1042, %v2238
        %v2285 = vmul.f32 %v1043, %v2238
        %v2286 = vmul.f32 %v1044, %v2238
        %v2335 = vrot.slane %v2239, 1
        %v2336 = vrot.slane %v2240, 1
        %v2337 = vsel %vm1215, %v2335, %v2336
        %v2338 = vrot.slane %v2241, 1
        %v2339 = vsel %vm1215, %v2336, %v2338
        %v2340 = vrot.slane %v2242, 1
        %v2341 = vrot.slane %v2243, 1
        %v2342 = vsel %vm1215, %v2340, %v2341
        %v2343 = vrot.slane %v2244, 1
        %v2344 = vsel %vm1215, %v2341, %v2343
        %v2345 = vrot.slane %v2245, 1
        %v2346 = vrot.slane %v2246, 1
        %v2347 = vsel %vm1215, %v2345, %v2346
        %v2348 = vrot.slane %v2247, 1
        %v2349 = vsel %vm1215, %v2346, %v2348
        %v2350 = vrot.slane %v2248, 1
        %v2351 = vrot.slane %v2249, 1
        %v2352 = vsel %vm1215, %v2350, %v2351
        %v2353 = vrot.slane %v2250, 1
        %v2354 = vsel %vm1215, %v2351, %v2353
        %v2355 = vrot.slane %v2251, 1
        %v2356 = vrot.slane %v2252, 1
        %v2357 = vsel %vm1215, %v2355, %v2356
        %v2358 = vrot.slane %v2253, 1
        %v2359 = vsel %vm1215, %v2356, %v2358
        %v2360 = vrot.slane %v2254, 1
        %v2361 = vrot.slane %v2255, 1
        %v2362 = vsel %vm1215, %v2360, %v2361
        %v2363 = vrot.slane %v2256, 1
        %v2364 = vsel %vm1215, %v2361, %v2363
        %v2365 = vrot.slane %v2257, 1
        %v2366 = vrot.slane %v2258, 1
        %v2367 = vsel %vm1215, %v2365, %v2366
        %v2368 = vrot.slane %v2259, 1
        %v2369 = vsel %vm1215, %v2366, %v2368
        %v2370 = vrot.slane %v2260, 1
        %v2371 = vrot.slane %v2261, 1
        %v2372 = vsel %vm1215, %v2370, %v2371
        %v2373 = vrot.slane %v2262, 1
        %v2374 = vsel %vm1215, %v2371, %v2373
        %v2375 = vrot.slane %v2263, 1
        %v2376 = vrot.slane %v2264, 1
        %v2377 = vsel %vm1215, %v2375, %v2376
        %v2378 = vrot.slane %v2265, 1
        %v2379 = vsel %vm1215, %v2376, %v2378
        %v2380 = vrot.slane %v2266, 1
        %v2381 = vrot.slane %v2267, 1
        %v2382 = vsel %vm1215, %v2380, %v2381
        %v2383 = vrot.slane %v2268, 1
        %v2384 = vsel %vm1215, %v2381, %v2383
        %v2385 = vrot.slane %v2269, 1
        %v2386 = vrot.slane %v2270, 1
        %v2387 = vsel %vm1215, %v2385, %v2386
        %v2388 = vrot.slane %v2271, 1
        %v2389 = vsel %vm1215, %v2386, %v2388
        %v2390 = vrot.slane %v2272, 1
        %v2391 = vrot.slane %v2273, 1
        %v2392 = vsel %vm1215, %v2390, %v2391
        %v2393 = vrot.slane %v2274, 1
        %v2394 = vsel %vm1215, %v2391, %v2393
        %v2395 = vrot.slane %v2275, 1
        %v2396 = vrot.slane %v2276, 1
        %v2397 = vsel %vm1215, %v2395, %v2396
        %v2398 = vrot.slane %v2277, 1
        %v2399 = vsel %vm1215, %v2396, %v2398
        %v2400 = vrot.slane %v2278, 1
        %v2401 = vrot.slane %v2279, 1
        %v2402 = vsel %vm1215, %v2400, %v2401
        %v2403 = vrot.slane %v2280, 1
        %v2404 = vsel %vm1215, %v2401, %v2403
        %v2405 = vrot.slane %v2281, 1
        %v2406 = vrot.slane %v2282, 1
        %v2407 = vsel %vm1215, %v2405, %v2406
        %v2408 = vrot.slane %v2283, 1
        %v2409 = vsel %vm1215, %v2406, %v2408
        %v2410 = vrot.slane %v2284, 1
        %v2411 = vrot.slane %v2285, 1
        %v2412 = vsel %vm1215, %v2410, %v2411
        %v2413 = vrot.slane %v2286, 1
        %v2414 = vsel %vm1215, %v2411, %v2413
        %v2447 = vadd.f32 %v2202, %v2337
        %v2448 = vadd.f32 %v2203, %v2339
        %v2449 = vadd.f32 %v2204, %v2342
        %v2450 = vadd.f32 %v2205, %v2344
        %v2451 = vadd.f32 %v2206, %v2347
        %v2452 = vadd.f32 %v2207, %v2349
        %v2453 = vadd.f32 %v2208, %v2352
        %v2454 = vadd.f32 %v2209, %v2354
        %v2455 = vadd.f32 %v2210, %v2357
        %v2456 = vadd.f32 %v2211, %v2359
        %v2457 = vadd.f32 %v2212, %v2362
        %v2458 = vadd.f32 %v2213, %v2364
        %v2459 = vadd.f32 %v2214, %v2367
        %v2460 = vadd.f32 %v2215, %v2369
        %v2461 = vadd.f32 %v2216, %v2372
        %v2462 = vadd.f32 %v2217, %v2374
        %v2463 = vadd.f32 %v2218, %v2377
        %v2464 = vadd.f32 %v2219, %v2379
        %v2465 = vadd.f32 %v2220, %v2382
        %v2466 = vadd.f32 %v2221, %v2384
        %v2467 = vadd.f32 %v2222, %v2387
        %v2468 = vadd.f32 %v2223, %v2389
        %v2469 = vadd.f32 %v2224, %v2392
        %v2470 = vadd.f32 %v2225, %v2394
        %v2471 = vadd.f32 %v2226, %v2397
        %v2472 = vadd.f32 %v2227, %v2399
        %v2473 = vadd.f32 %v2228, %v2402
        %v2474 = vadd.f32 %v2229, %v2404
        %v2475 = vadd.f32 %v2230, %v2407
        %v2476 = vadd.f32 %v2231, %v2409
        %v2477 = vadd.f32 %v2232, %v2412
        %v2478 = vadd.f32 %v2233, %v2414
        %v2479 = vld [vmem:[#allocation8 + $0x8] sm:$0x1]
        %v2480 = vlaneseq
        %v2481 = vshrl.u32 %v2480, 7
        %v2482 = vsub.s32 0, %v2481
        %v2483 = vrot.slane %v2479, %v2482
        %v2484 = vmul.f32 %v997, %v2483
        %v2485 = vmul.f32 %v998, %v2483
        %v2486 = vmul.f32 %v999, %v2483
        %v2487 = vmul.f32 %v1000, %v2483
        %v2488 = vmul.f32 %v1001, %v2483
        %v2489 = vmul.f32 %v1002, %v2483
        %v2490 = vmul.f32 %v1003, %v2483
        %v2491 = vmul.f32 %v1004, %v2483
        %v2492 = vmul.f32 %v1005, %v2483
        %v2493 = vmul.f32 %v1006, %v2483
        %v2494 = vmul.f32 %v1007, %v2483
        %v2495 = vmul.f32 %v1008, %v2483
        %v2496 = vmul.f32 %v1009, %v2483
        %v2497 = vmul.f32 %v1010, %v2483
        %v2498 = vmul.f32 %v1011, %v2483
        %v2499 = vmul.f32 %v1012, %v2483
        %v2500 = vmul.f32 %v1013, %v2483
        %v2501 = vmul.f32 %v1014, %v2483
        %v2502 = vmul.f32 %v1015, %v2483
        %v2503 = vmul.f32 %v1016, %v2483
        %v2504 = vmul.f32 %v1017, %v2483
        %v2505 = vmul.f32 %v1018, %v2483
        %v2506 = vmul.f32 %v1019, %v2483
        %v2507 = vmul.f32 %v1020, %v2483
        %v2508 = vmul.f32 %v1021, %v2483
        %v2509 = vmul.f32 %v1022, %v2483
        %v2510 = vmul.f32 %v1023, %v2483
        %v2511 = vmul.f32 %v1024, %v2483
        %v2512 = vmul.f32 %v1025, %v2483
        %v2513 = vmul.f32 %v1026, %v2483
        %v2514 = vmul.f32 %v1027, %v2483
        %v2515 = vmul.f32 %v1028, %v2483
        %v2516 = vmul.f32 %v1029, %v2483
        %v2517 = vmul.f32 %v1030, %v2483
        %v2518 = vmul.f32 %v1031, %v2483
        %v2519 = vmul.f32 %v1032, %v2483
        %v2520 = vmul.f32 %v1033, %v2483
        %v2521 = vmul.f32 %v1034, %v2483
        %v2522 = vmul.f32 %v1035, %v2483
        %v2523 = vmul.f32 %v1036, %v2483
        %v2524 = vmul.f32 %v1037, %v2483
        %v2525 = vmul.f32 %v1038, %v2483
        %v2526 = vmul.f32 %v1039, %v2483
        %v2527 = vmul.f32 %v1040, %v2483
        %v2528 = vmul.f32 %v1041, %v2483
        %v2529 = vmul.f32 %v1042, %v2483
        %v2530 = vmul.f32 %v1043, %v2483
        %v2531 = vmul.f32 %v1044, %v2483
        %v2580 = vrot.slane %v2484, 2
        %v2581 = vrot.slane %v2485, 2
        %v2582 = vsel %vm1461, %v2580, %v2581
        %v2583 = vrot.slane %v2486, 2
        %v2584 = vsel %vm1461, %v2581, %v2583
        %v2585 = vrot.slane %v2487, 2
        %v2586 = vrot.slane %v2488, 2
        %v2587 = vsel %vm1461, %v2585, %v2586
        %v2588 = vrot.slane %v2489, 2
        %v2589 = vsel %vm1461, %v2586, %v2588
        %v2590 = vrot.slane %v2490, 2
        %v2591 = vrot.slane %v2491, 2
        %v2592 = vsel %vm1461, %v2590, %v2591
        %v2593 = vrot.slane %v2492, 2
        %v2594 = vsel %vm1461, %v2591, %v2593
        %v2595 = vrot.slane %v2493, 2
        %v2596 = vrot.slane %v2494, 2
        %v2597 = vsel %vm1461, %v2595, %v2596
        %v2598 = vrot.slane %v2495, 2
        %v2599 = vsel %vm1461, %v2596, %v2598
        %v2600 = vrot.slane %v2496, 2
        %v2601 = vrot.slane %v2497, 2
        %v2602 = vsel %vm1461, %v2600, %v2601
        %v2603 = vrot.slane %v2498, 2
        %v2604 = vsel %vm1461, %v2601, %v2603
        %v2605 = vrot.slane %v2499, 2
        %v2606 = vrot.slane %v2500, 2
        %v2607 = vsel %vm1461, %v2605, %v2606
        %v2608 = vrot.slane %v2501, 2
        %v2609 = vsel %vm1461, %v2606, %v2608
        %v2610 = vrot.slane %v2502, 2
        %v2611 = vrot.slane %v2503, 2
        %v2612 = vsel %vm1461, %v2610, %v2611
        %v2613 = vrot.slane %v2504, 2
        %v2614 = vsel %vm1461, %v2611, %v2613
        %v2615 = vrot.slane %v2505, 2
        %v2616 = vrot.slane %v2506, 2
        %v2617 = vsel %vm1461, %v2615, %v2616
        %v2618 = vrot.slane %v2507, 2
        %v2619 = vsel %vm1461, %v2616, %v2618
        %v2620 = vrot.slane %v2508, 2
        %v2621 = vrot.slane %v2509, 2
        %v2622 = vsel %vm1461, %v2620, %v2621
        %v2623 = vrot.slane %v2510, 2
        %v2624 = vsel %vm1461, %v2621, %v2623
        %v2625 = vrot.slane %v2511, 2
        %v2626 = vrot.slane %v2512, 2
        %v2627 = vsel %vm1461, %v2625, %v2626
        %v2628 = vrot.slane %v2513, 2
        %v2629 = vsel %vm1461, %v2626, %v2628
        %v2630 = vrot.slane %v2514, 2
        %v2631 = vrot.slane %v2515, 2
        %v2632 = vsel %vm1461, %v2630, %v2631
        %v2633 = vrot.slane %v2516, 2
        %v2634 = vsel %vm1461, %v2631, %v2633
        %v2635 = vrot.slane %v2517, 2
        %v2636 = vrot.slane %v2518, 2
        %v2637 = vsel %vm1461, %v2635, %v2636
        %v2638 = vrot.slane %v2519, 2
        %v2639 = vsel %vm1461, %v2636, %v2638
        %v2640 = vrot.slane %v2520, 2
        %v2641 = vrot.slane %v2521, 2
        %v2642 = vsel %vm1461, %v2640, %v2641
        %v2643 = vrot.slane %v2522, 2
        %v2644 = vsel %vm1461, %v2641, %v2643
        %v2645 = vrot.slane %v2523, 2
        %v2646 = vrot.slane %v2524, 2
        %v2647 = vsel %vm1461, %v2645, %v2646
        %v2648 = vrot.slane %v2525, 2
        %v2649 = vsel %vm1461, %v2646, %v2648
        %v2650 = vrot.slane %v2526, 2
        %v2651 = vrot.slane %v2527, 2
        %v2652 = vsel %vm1461, %v2650, %v2651
        %v2653 = vrot.slane %v2528, 2
        %v2654 = vsel %vm1461, %v2651, %v2653
        %v2655 = vrot.slane %v2529, 2
        %v2656 = vrot.slane %v2530, 2
        %v2657 = vsel %vm1461, %v2655, %v2656
        %v2658 = vrot.slane %v2531, 2
        %v2659 = vsel %vm1461, %v2656, %v2658
        %v2692 = vadd.f32 %v2447, %v2582
        %v2693 = vadd.f32 %v2448, %v2584
        %v2694 = vadd.f32 %v2449, %v2587
        %v2695 = vadd.f32 %v2450, %v2589
        %v2696 = vadd.f32 %v2451, %v2592
        %v2697 = vadd.f32 %v2452, %v2594
        %v2698 = vadd.f32 %v2453, %v2597
        %v2699 = vadd.f32 %v2454, %v2599
        %v2700 = vadd.f32 %v2455, %v2602
        %v2701 = vadd.f32 %v2456, %v2604
        %v2702 = vadd.f32 %v2457, %v2607
        %v2703 = vadd.f32 %v2458, %v2609
        %v2704 = vadd.f32 %v2459, %v2612
        %v2705 = vadd.f32 %v2460, %v2614
        %v2706 = vadd.f32 %v2461, %v2617
        %v2707 = vadd.f32 %v2462, %v2619
        %v2708 = vadd.f32 %v2463, %v2622
        %v2709 = vadd.f32 %v2464, %v2624
        %v2710 = vadd.f32 %v2465, %v2627
        %v2711 = vadd.f32 %v2466, %v2629
        %v2712 = vadd.f32 %v2467, %v2632
        %v2713 = vadd.f32 %v2468, %v2634
        %v2714 = vadd.f32 %v2469, %v2637
        %v2715 = vadd.f32 %v2470, %v2639
        %v2716 = vadd.f32 %v2471, %v2642
        %v2717 = vadd.f32 %v2472, %v2644
        %v2718 = vadd.f32 %v2473, %v2647
        %v2719 = vadd.f32 %v2474, %v2649
        %v2720 = vadd.f32 %v2475, %v2652
        %v2721 = vadd.f32 %v2476, %v2654
        %v2722 = vadd.f32 %v2477, %v2657
        %v2723 = vadd.f32 %v2478, %v2659
        %v2724 = vld [vmem:[%s4] sm:$0x1]
        %v2726 = vlaneseq
        %v2727 = vshrl.u32 %v2726, 7
        %v2728 = vsub.s32 0, %v2727
        %v2729 = vrot.slane %v2724, %v2728
        %v2731 = vadd.f32 %v2692, %v2729
        %v2732 = vadd.f32 %v2693, %v2729
        %v2733 = vadd.f32 %v2694, %v2729
        %v2734 = vadd.f32 %v2695, %v2729
        %v2735 = vadd.f32 %v2696, %v2729
        %v2736 = vadd.f32 %v2697, %v2729
        %v2737 = vadd.f32 %v2698, %v2729
        %v2738 = vadd.f32 %v2699, %v2729
        %v2739 = vadd.f32 %v2700, %v2729
        %v2740 = vadd.f32 %v2701, %v2729
        %v2741 = vadd.f32 %v2702, %v2729
        %v2742 = vadd.f32 %v2703, %v2729
        %v2743 = vadd.f32 %v2704, %v2729
        %v2744 = vadd.f32 %v2705, %v2729
        %v2745 = vadd.f32 %v2706, %v2729
        %v2746 = vadd.f32 %v2707, %v2729
        %v2747 = vadd.f32 %v2708, %v2729
        %v2748 = vadd.f32 %v2709, %v2729
        %v2749 = vadd.f32 %v2710, %v2729
        %v2750 = vadd.f32 %v2711, %v2729
        %v2751 = vadd.f32 %v2712, %v2729
        %v2752 = vadd.f32 %v2713, %v2729
        %v2753 = vadd.f32 %v2714, %v2729
        %v2754 = vadd.f32 %v2715, %v2729
        %v2755 = vadd.f32 %v2716, %v2729
        %v2756 = vadd.f32 %v2717, %v2729
        %v2757 = vadd.f32 %v2718, %v2729
        %v2758 = vadd.f32 %v2719, %v2729
        %v2759 = vadd.f32 %v2720, %v2729
        %v2760 = vadd.f32 %v2721, %v2729
        %v2761 = vadd.f32 %v2722, %v2729
        %v2762 = vadd.f32 %v2723, %v2729
        %v2763 = vxor.u32 %v2731, 2147483648
        %v2764 = vxor.u32 %v2732, 2147483648
        %v2765 = vxor.u32 %v2733, 2147483648
        %v2766 = vxor.u32 %v2734, 2147483648
        %v2767 = vxor.u32 %v2735, 2147483648
        %v2768 = vxor.u32 %v2736, 2147483648
        %v2769 = vxor.u32 %v2737, 2147483648
        %v2770 = vxor.u32 %v2738, 2147483648
        %v2771 = vxor.u32 %v2739, 2147483648
        %v2772 = vxor.u32 %v2740, 2147483648
        %v2773 = vxor.u32 %v2741, 2147483648
        %v2774 = vxor.u32 %v2742, 2147483648
        %v2775 = vxor.u32 %v2743, 2147483648
        %v2776 = vxor.u32 %v2744, 2147483648
        %v2777 = vxor.u32 %v2745, 2147483648
        %v2778 = vxor.u32 %v2746, 2147483648
        %v2779 = vxor.u32 %v2747, 2147483648
        %v2780 = vxor.u32 %v2748, 2147483648
        %v2781 = vxor.u32 %v2749, 2147483648
        %v2782 = vxor.u32 %v2750, 2147483648
        %v2783 = vxor.u32 %v2751, 2147483648
        %v2784 = vxor.u32 %v2752, 2147483648
        %v2785 = vxor.u32 %v2753, 2147483648
        %v2786 = vxor.u32 %v2754, 2147483648
        %v2787 = vxor.u32 %v2755, 2147483648
        %v2788 = vxor.u32 %v2756, 2147483648
        %v2789 = vxor.u32 %v2757, 2147483648
        %v2790 = vxor.u32 %v2758, 2147483648
        %v2791 = vxor.u32 %v2759, 2147483648
        %v2792 = vxor.u32 %v2760, 2147483648
        %v2793 = vxor.u32 %v2761, 2147483648
        %v2794 = vxor.u32 %v2762, 2147483648
        %v2795 = vmul.f32 %v2763, 1.442695
        %v2796 = vpow.pop %v2795
        %v2797 = vmul.f32 %v2764, 1.442695
        %v2798 = vpow.pop %v2797
        %v2799 = vmul.f32 %v2765, 1.442695
        %v2800 = vpow.pop %v2799
        %v2801 = vmul.f32 %v2766, 1.442695
        %v2802 = vpow.pop %v2801
        %v2803 = vmul.f32 %v2767, 1.442695
        %v2804 = vpow.pop %v2803
        %v2805 = vmul.f32 %v2768, 1.442695
        %v2806 = vpow.pop %v2805
        %v2807 = vmul.f32 %v2769, 1.442695
        %v2808 = vpow.pop %v2807
        %v2809 = vmul.f32 %v2770, 1.442695
        %v2810 = vpow.pop %v2809
        %v2811 = vmul.f32 %v2771, 1.442695
        %v2812 = vpow.pop %v2811
        %v2813 = vmul.f32 %v2772, 1.442695
        %v2814 = vpow.pop %v2813
        %v2815 = vmul.f32 %v2773, 1.442695
        %v2816 = vpow.pop %v2815
        %v2817 = vmul.f32 %v2774, 1.442695
        %v2818 = vpow.pop %v2817
        %v2819 = vmul.f32 %v2775, 1.442695
        %v2820 = vpow.pop %v2819
        %v2821 = vmul.f32 %v2776, 1.442695
        %v2822 = vpow.pop %v2821
        %v2823 = vmul.f32 %v2777, 1.442695
        %v2824 = vpow.pop %v2823
        %v2825 = vmul.f32 %v2778, 1.442695
        %v2826 = vpow.pop %v2825
        %v2827 = vmul.f32 %v2779, 1.442695
        %v2828 = vpow.pop %v2827
        %v2829 = vmul.f32 %v2780, 1.442695
        %v2830 = vpow.pop %v2829
        %v2831 = vmul.f32 %v2781, 1.442695
        %v2832 = vpow.pop %v2831
        %v2833 = vmul.f32 %v2782, 1.442695
        %v2834 = vpow.pop %v2833
        %v2835 = vmul.f32 %v2783, 1.442695
        %v2836 = vpow.pop %v2835
        %v2837 = vmul.f32 %v2784, 1.442695
        %v2838 = vpow.pop %v2837
        %v2839 = vmul.f32 %v2785, 1.442695
        %v2840 = vpow.pop %v2839
        %v2841 = vmul.f32 %v2786, 1.442695
        %v2842 = vpow.pop %v2841
        %v2843 = vmul.f32 %v2787, 1.442695
        %v2844 = vpow.pop %v2843
        %v2845 = vmul.f32 %v2788, 1.442695
        %v2846 = vpow.pop %v2845
        %v2847 = vmul.f32 %v2789, 1.442695
        %v2848 = vpow.pop %v2847
        %v2849 = vmul.f32 %v2790, 1.442695
        %v2850 = vpow.pop %v2849
        %v2851 = vmul.f32 %v2791, 1.442695
        %v2852 = vpow.pop %v2851
        %v2853 = vmul.f32 %v2792, 1.442695
        %v2854 = vpow.pop %v2853
        %v2855 = vmul.f32 %v2793, 1.442695
        %v2856 = vpow.pop %v2855
        %v2857 = vmul.f32 %v2794, 1.442695
        %v2858 = vpow.pop %v2857
        %v2859 = vadd.f32 %v2796, 1.0
        %v2860 = vadd.f32 %v2798, 1.0
        %v2861 = vadd.f32 %v2800, 1.0
        %v2862 = vadd.f32 %v2802, 1.0
        %v2863 = vadd.f32 %v2804, 1.0
        %v2864 = vadd.f32 %v2806, 1.0
        %v2865 = vadd.f32 %v2808, 1.0
        %v2866 = vadd.f32 %v2810, 1.0
        %v2867 = vadd.f32 %v2812, 1.0
        %v2868 = vadd.f32 %v2814, 1.0
        %v2869 = vadd.f32 %v2816, 1.0
        %v2870 = vadd.f32 %v2818, 1.0
        %v2871 = vadd.f32 %v2820, 1.0
        %v2872 = vadd.f32 %v2822, 1.0
        %v2873 = vadd.f32 %v2824, 1.0
        %v2874 = vadd.f32 %v2826, 1.0
        %v2875 = vadd.f32 %v2828, 1.0
        %v2876 = vadd.f32 %v2830, 1.0
        %v2877 = vadd.f32 %v2832, 1.0
        %v2878 = vadd.f32 %v2834, 1.0
        %v2879 = vadd.f32 %v2836, 1.0
        %v2880 = vadd.f32 %v2838, 1.0
        %v2881 = vadd.f32 %v2840, 1.0
        %v2882 = vadd.f32 %v2842, 1.0
        %v2883 = vadd.f32 %v2844, 1.0
        %v2884 = vadd.f32 %v2846, 1.0
        %v2885 = vadd.f32 %v2848, 1.0
        %v2886 = vadd.f32 %v2850, 1.0
        %v2887 = vadd.f32 %v2852, 1.0
        %v2888 = vadd.f32 %v2854, 1.0
        %v2889 = vadd.f32 %v2856, 1.0
        %v2890 = vadd.f32 %v2858, 1.0
        %v2891 = vrcp.pop %v2859
        %v2892 = vmul.f32 1.0, %v2891
        %v2893 = vrcp.pop %v2860
        %v2894 = vmul.f32 1.0, %v2893
        %v2895 = vrcp.pop %v2861
        %v2896 = vmul.f32 1.0, %v2895
        %v2897 = vrcp.pop %v2862
        %v2898 = vmul.f32 1.0, %v2897
        %v2899 = vrcp.pop %v2863
        %v2900 = vmul.f32 1.0, %v2899
        %v2901 = vrcp.pop %v2864
        %v2902 = vmul.f32 1.0, %v2901
        %v2903 = vrcp.pop %v2865
        %v2904 = vmul.f32 1.0, %v2903
        %v2905 = vrcp.pop %v2866
        %v2906 = vmul.f32 1.0, %v2905
        %v2907 = vrcp.pop %v2867
        %v2908 = vmul.f32 1.0, %v2907
        %v2909 = vrcp.pop %v2868
        %v2910 = vmul.f32 1.0, %v2909
        %v2911 = vrcp.pop %v2869
        %v2912 = vmul.f32 1.0, %v2911
        %v2913 = vrcp.pop %v2870
        %v2914 = vmul.f32 1.0, %v2913
        %v2915 = vrcp.pop %v2871
        %v2916 = vmul.f32 1.0, %v2915
        %v2917 = vrcp.pop %v2872
        %v2918 = vmul.f32 1.0, %v2917
        %v2919 = vrcp.pop %v2873
        %v2920 = vmul.f32 1.0, %v2919
        %v2921 = vrcp.pop %v2874
        %v2922 = vmul.f32 1.0, %v2921
        %v2923 = vrcp.pop %v2875
        %v2924 = vmul.f32 1.0, %v2923
        %v2925 = vrcp.pop %v2876
        %v2926 = vmul.f32 1.0, %v2925
        %v2927 = vrcp.pop %v2877
        %v2928 = vmul.f32 1.0, %v2927
        %v2929 = vrcp.pop %v2878
        %v2930 = vmul.f32 1.0, %v2929
        %v2931 = vrcp.pop %v2879
        %v2932 = vmul.f32 1.0, %v2931
        %v2933 = vrcp.pop %v2880
        %v2934 = vmul.f32 1.0, %v2933
        %v2935 = vrcp.pop %v2881
        %v2936 = vmul.f32 1.0, %v2935
        %v2937 = vrcp.pop %v2882
        %v2938 = vmul.f32 1.0, %v2937
        %v2939 = vrcp.pop %v2883
        %v2940 = vmul.f32 1.0, %v2939
        %v2941 = vrcp.pop %v2884
        %v2942 = vmul.f32 1.0, %v2941
        %v2943 = vrcp.pop %v2885
        %v2944 = vmul.f32 1.0, %v2943
        %v2945 = vrcp.pop %v2886
        %v2946 = vmul.f32 1.0, %v2945
        %v2947 = vrcp.pop %v2887
        %v2948 = vmul.f32 1.0, %v2947
        %v2949 = vrcp.pop %v2888
        %v2950 = vmul.f32 1.0, %v2949
        %v2951 = vrcp.pop %v2889
        %v2952 = vmul.f32 1.0, %v2951
        %v2953 = vrcp.pop %v2890
        %v2954 = vmul.f32 1.0, %v2953
        %v2955 = vmul.f32 %v2731, %v2892
        %v2956 = vmul.f32 %v2732, %v2894
        %v2957 = vmul.f32 %v2733, %v2896
        %v2958 = vmul.f32 %v2734, %v2898
        %v2959 = vmul.f32 %v2735, %v2900
        %v2960 = vmul.f32 %v2736, %v2902
        %v2961 = vmul.f32 %v2737, %v2904
        %v2962 = vmul.f32 %v2738, %v2906
        %v2963 = vmul.f32 %v2739, %v2908
        %v2964 = vmul.f32 %v2740, %v2910
        %v2965 = vmul.f32 %v2741, %v2912
        %v2966 = vmul.f32 %v2742, %v2914
        %v2967 = vmul.f32 %v2743, %v2916
        %v2968 = vmul.f32 %v2744, %v2918
        %v2969 = vmul.f32 %v2745, %v2920
        %v2970 = vmul.f32 %v2746, %v2922
        %v2971 = vmul.f32 %v2747, %v2924
        %v2972 = vmul.f32 %v2748, %v2926
        %v2973 = vmul.f32 %v2749, %v2928
        %v2974 = vmul.f32 %v2750, %v2930
        %v2975 = vmul.f32 %v2751, %v2932
        %v2976 = vmul.f32 %v2752, %v2934
        %v2977 = vmul.f32 %v2753, %v2936
        %v2978 = vmul.f32 %v2754, %v2938
        %v2979 = vmul.f32 %v2755, %v2940
        %v2980 = vmul.f32 %v2756, %v2942
        %v2981 = vmul.f32 %v2757, %v2944
        %v2982 = vmul.f32 %v2758, %v2946
        %v2983 = vmul.f32 %v2759, %v2948
        %v2984 = vmul.f32 %v2760, %v2950
        %v2985 = vmul.f32 %v2761, %v2952
        %v2986 = vmul.f32 %v2762, %v2954
        %v2987 = vmul.f32 %v2955, 1.6768
        %v2988 = vmul.f32 %v2956, 1.6768
        %v2989 = vmul.f32 %v2957, 1.6768
        %v2990 = vmul.f32 %v2958, 1.6768
        %v2991 = vmul.f32 %v2959, 1.6768
        %v2992 = vmul.f32 %v2960, 1.6768
        %v2993 = vmul.f32 %v2961, 1.6768
        %v2994 = vmul.f32 %v2962, 1.6768
        %v2995 = vmul.f32 %v2963, 1.6768
        %v2996 = vmul.f32 %v2964, 1.6768
        %v2997 = vmul.f32 %v2965, 1.6768
        %v2998 = vmul.f32 %v2966, 1.6768
        %v2999 = vmul.f32 %v2967, 1.6768
        %v3000 = vmul.f32 %v2968, 1.6768
        %v3001 = vmul.f32 %v2969, 1.6768
        %v3002 = vmul.f32 %v2970, 1.6768
        %v3003 = vmul.f32 %v2971, 1.6768
        %v3004 = vmul.f32 %v2972, 1.6768
        %v3005 = vmul.f32 %v2973, 1.6768
        %v3006 = vmul.f32 %v2974, 1.6768
        %v3007 = vmul.f32 %v2975, 1.6768
        %v3008 = vmul.f32 %v2976, 1.6768
        %v3009 = vmul.f32 %v2977, 1.6768
        %v3010 = vmul.f32 %v2978, 1.6768
        %v3011 = vmul.f32 %v2979, 1.6768
        %v3012 = vmul.f32 %v2980, 1.6768
        %v3013 = vmul.f32 %v2981, 1.6768
        %v3014 = vmul.f32 %v2982, 1.6768
        %v3015 = vmul.f32 %v2983, 1.6768
        %v3016 = vmul.f32 %v2984, 1.6768
        %v3017 = vmul.f32 %v2985, 1.6768
        %v3018 = vmul.f32 %v2986, 1.6768
        %v3019 = vpack.c.bf16 %v2988, %v2987
        %v3020 = vpack.c.bf16 %v2990, %v2989
        %v3021 = vpack.c.bf16 %v2992, %v2991
        %v3022 = vpack.c.bf16 %v2994, %v2993
        %v3023 = vpack.c.bf16 %v2996, %v2995
        %v3024 = vpack.c.bf16 %v2998, %v2997
        %v3025 = vpack.c.bf16 %v3000, %v2999
        %v3026 = vpack.c.bf16 %v3002, %v3001
        %v3027 = vpack.c.bf16 %v3004, %v3003
        %v3028 = vpack.c.bf16 %v3006, %v3005
        %v3029 = vpack.c.bf16 %v3008, %v3007
        %v3030 = vpack.c.bf16 %v3010, %v3009
        %v3031 = vpack.c.bf16 %v3012, %v3011
        %v3032 = vpack.c.bf16 %v3014, %v3013
        %v3033 = vpack.c.bf16 %v3016, %v3015
        %v3034 = vpack.c.bf16 %v3018, %v3017
        %v3051 = vunpack.c.l.b16 %v3019
        %v3052 = vunpack.c.h.b16 %v3019
        %v3053 = vunpack.c.l.b16 %v3020
        %v3054 = vunpack.c.h.b16 %v3020
        %v3055 = vunpack.c.l.b16 %v3021
        %v3056 = vunpack.c.h.b16 %v3021
        %v3057 = vunpack.c.l.b16 %v3022
        %v3058 = vunpack.c.h.b16 %v3022
        %v3059 = vunpack.c.l.b16 %v3023
        %v3060 = vunpack.c.h.b16 %v3023
        %v3061 = vunpack.c.l.b16 %v3024
        %v3062 = vunpack.c.h.b16 %v3024
        %v3063 = vunpack.c.l.b16 %v3025
        %v3064 = vunpack.c.h.b16 %v3025
        %v3065 = vunpack.c.l.b16 %v3026
        %v3066 = vunpack.c.h.b16 %v3026
        %v3067 = vunpack.c.l.b16 %v3027
        %v3068 = vunpack.c.h.b16 %v3027
        %v3069 = vunpack.c.l.b16 %v3028
        %v3070 = vunpack.c.h.b16 %v3028
        %v3071 = vunpack.c.l.b16 %v3029
        %v3072 = vunpack.c.h.b16 %v3029
        %v3073 = vunpack.c.l.b16 %v3030
        %v3074 = vunpack.c.h.b16 %v3030
        %v3075 = vunpack.c.l.b16 %v3031
        %v3076 = vunpack.c.h.b16 %v3031
        %v3077 = vunpack.c.l.b16 %v3032
        %v3078 = vunpack.c.h.b16 %v3032
        %v3079 = vunpack.c.l.b16 %v3033
        %v3080 = vunpack.c.h.b16 %v3033
        %v3081 = vunpack.c.l.b16 %v3034
        %v3082 = vunpack.c.h.b16 %v3034
        %v3083 = vpack.c.b16 %v3051, %v3051
        %v3084 = vpack.c.b16 %v3052, %v3052
        %v3085 = vpack.c.b16 %v3053, %v3053
        %v3086 = vpack.c.b16 %v3054, %v3054
        %v3087 = vpack.c.b16 %v3055, %v3055
        %v3088 = vpack.c.b16 %v3056, %v3056
        %v3089 = vpack.c.b16 %v3057, %v3057
        %v3090 = vpack.c.b16 %v3058, %v3058
        %v3091 = vpack.c.b16 %v3059, %v3059
        %v3092 = vpack.c.b16 %v3060, %v3060
        %v3093 = vpack.c.b16 %v3061, %v3061
        %v3094 = vpack.c.b16 %v3062, %v3062
        %v3095 = vpack.c.b16 %v3063, %v3063
        %v3096 = vpack.c.b16 %v3064, %v3064
        %v3097 = vpack.c.b16 %v3065, %v3065
        %v3098 = vpack.c.b16 %v3066, %v3066
        %v3099 = vpack.c.b16 %v3067, %v3067
        %v3100 = vpack.c.b16 %v3068, %v3068
        %v3101 = vpack.c.b16 %v3069, %v3069
        %v3102 = vpack.c.b16 %v3070, %v3070
        %v3103 = vpack.c.b16 %v3071, %v3071
        %v3104 = vpack.c.b16 %v3072, %v3072
        %v3105 = vpack.c.b16 %v3073, %v3073
        %v3106 = vpack.c.b16 %v3074, %v3074
        %v3107 = vpack.c.b16 %v3075, %v3075
        %v3108 = vpack.c.b16 %v3076, %v3076
        %v3109 = vpack.c.b16 %v3077, %v3077
        %v3110 = vpack.c.b16 %v3078, %v3078
        %v3111 = vpack.c.b16 %v3079, %v3079
        %v3112 = vpack.c.b16 %v3080, %v3080
        %v3113 = vpack.c.b16 %v3081, %v3081
        %v3114 = vpack.c.b16 %v3082, %v3082
        %3147 = vst [vmem:[%s271] sm:$0xf] %v3083
        %3148 = vst [vmem:[%s271 + $0x4] sm:$0xf] %v3084
        %3149 = vst [vmem:[%s271 + $0x8] sm:$0xf] %v3085
        %3150 = vst [vmem:[%s271 + $0xc] sm:$0xf] %v3086
        %3151 = vst [vmem:[%s271 + $0x10] sm:$0xf] %v3087
        %3152 = vst [vmem:[%s271 + $0x14] sm:$0xf] %v3088
        %3153 = vst [vmem:[%s271 + $0x18] sm:$0xf] %v3089
        %3154 = vst [vmem:[%s271 + $0x1c] sm:$0xf] %v3090
        %3155 = vst [vmem:[%s271 + $0x20] sm:$0xf] %v3091
        %3156 = vst [vmem:[%s271 + $0x24] sm:$0xf] %v3092
        %3157 = vst [vmem:[%s271 + $0x28] sm:$0xf] %v3093
        %3158 = vst [vmem:[%s271 + $0x2c] sm:$0xf] %v3094
        %3159 = vst [vmem:[%s271 + $0x30] sm:$0xf] %v3095
        %3160 = vst [vmem:[%s271 + $0x34] sm:$0xf] %v3096
        %3161 = vst [vmem:[%s271 + $0x38] sm:$0xf] %v3097
        %3162 = vst [vmem:[%s271 + $0x3c] sm:$0xf] %v3098
        %3163 = vst [vmem:[%s271 + $0x40] sm:$0xf] %v3099
        %3164 = vst [vmem:[%s271 + $0x44] sm:$0xf] %v3100
        %3165 = vst [vmem:[%s271 + $0x48] sm:$0xf] %v3101
        %3166 = vst [vmem:[%s271 + $0x4c] sm:$0xf] %v3102
        %3167 = vst [vmem:[%s271 + $0x50] sm:$0xf] %v3103
        %3168 = vst [vmem:[%s271 + $0x54] sm:$0xf] %v3104
        %3169 = vst [vmem:[%s271 + $0x58] sm:$0xf] %v3105
        %3170 = vst [vmem:[%s271 + $0x5c] sm:$0xf] %v3106
        %3171 = vst [vmem:[%s271 + $0x60] sm:$0xf] %v3107
        %3172 = vst [vmem:[%s271 + $0x64] sm:$0xf] %v3108
        %3173 = vst [vmem:[%s271 + $0x68] sm:$0xf] %v3109
        %3174 = vst [vmem:[%s271 + $0x6c] sm:$0xf] %v3110
        %3175 = vst [vmem:[%s271 + $0x70] sm:$0xf] %v3111
        %3176 = vst [vmem:[%s271 + $0x74] sm:$0xf] %v3112
        %3177 = vst [vmem:[%s271 + $0x78] sm:$0xf] %v3113
        %3178 = vst [vmem:[%s271 + $0x7c] sm:$0xf] %v3114
        %s3179 = sand.u32 %s141, 1
        %s3180 = scalar_lea.sflag [#allocation5], %s3179
        %s3181 = sand.u32 %s141, 1
        %s3182 = smul.addr %s3181, 128
        %s3183 = scalar_lea.vmem [#allocation9], %s3182
        // Predicated region
        $region53: #{tpu_custom_call.1} parent=39 // pred_check
          %p3184 = pneg %p151
        $region54: #{tpu_custom_call.1} parent=39 // pred_check_branch
          %3186 = sbr.rel (%p3184) target = $region56
        $region55: #{tpu_custom_call.1} parent=39 // pred_region
          %s3188 = ssub.s32 2048, 2048
          %3189 = vsyncadd %s3180, %s3188
          %s3190 = smul.addr %s23, 32
          %s3191 = smul.addr %s3190, 64
          %s3192 = scalar_lea.hbm %s5, %s3191
          %s3193 = sshll.u32 %s3183, 4
          %s3194 = int_to_ptr.vmem [resolvable:$true] %s3193
          %3199 = dma.vmem_to_hbm [thread:$0]  %s3194, 2048, %s3192, %s3180, 64, 64, 4
        $region56: #{tpu_custom_call.1} parent=39 // pred_fallthru
          _
      $region40: #{tpu_custom_call.1} parent=5 // pred_fallthru
        _
      %p3200 = scmp.le.s32.totalorder 2, %s18
      // Predicated region
      $region57: #{tpu_custom_call.1} parent=5 // pred_check
        %p3201 = pneg %p3200
      $region58: #{tpu_custom_call.1} parent=5 // pred_check_branch
        %3203 = sbr.rel (%p3201) target = $region60
      $region59: #{tpu_custom_call.1} parent=5 // pred_region
        %s3204 = ssub.s32 %s18, 2
        // Predicated region
        $region61: #{tpu_custom_call.1} parent=59 // pred_check
          %p3205 = pneg %p157
        $region62: #{tpu_custom_call.1} parent=59 // pred_check_branch
          %3207 = sbr.rel (%p3205) target = $region64
        $region63: #{tpu_custom_call.1} parent=59 // pred_region
          %s3208 = sand.u32 %s142, 1
          %s3209 = scalar_lea.sflag [#allocation5], %s3208
          %s3210 = sand.u32 %s142, 1
          %s3211 = smul.addr %s3210, 128
          %s3212 = scalar_lea.vmem [#allocation9], %s3211
          %3213 = dma.done %s3209, 2048
        $region64: #{tpu_custom_call.1} parent=59 // pred_fallthru
          _
      $region60: #{tpu_custom_call.1} parent=5 // pred_fallthru
        _
    $region6: #{tpu_custom_call.1} parent=1 // loop_footer
      %s22 = sadd.s32 1, %s18
    $region7: #{tpu_custom_call.1} parent=1 // loop_footer_branch
      %17 = sbr.rel target = $region3
    $region8: #{tpu_custom_call.1} parent=1 // loop_exit
      _
    %3214 = vsyncpa [#allocation4], 1
    %s3215 = scalar_lea.sflag [#allocation4], 1
    %3216 = vsyncpa %s3215, 1
    %3217 = vsyncpa [#allocation7], 1
    %3218 = vsyncpa [#allocation5], 1
    %s3219 = scalar_lea.sflag [#allocation5], 1
    %3220 = vsyncpa %s3219, 1

</llo_original>
